<compile_context>
chip_gen: v5e
topology: v5e:2x2
jax: 0.10.0
libtpu: 0.0.40
codegen_flags: <defaults>
</compile_context>

<pallas_src>
import numpy as np
import jax
import jax.numpy as jnp
from jax.experimental import pallas as pl
from jax.experimental.pallas import tpu as pltpu


def _make_banded_weights_np(w_dhwio_np, W, dtype=jnp.bfloat16):
    """Fold kh + kw taps, channel contraction and W zero-padding of a 3x3x3 'same' conv
    into 3 banded matrices (one per kd tap), built once in numpy.

    w_dhwio_np: (3, 3, 3, Cin, Cout) numpy array.
    Returns jnp array of shape (3, 3*W*Cin, W*Cout) with
      band[kd, kh*W*Cin + wi*Cin + ci, wo*Cout + co] = w[kd, kh, kw, ci, co],
      wi = wo + kw - 1 (padding = 1 along W; out-of-range taps stay zero)."""
    kD, kH, kW, Cin, Cout = w_dhwio_np.shape
    band = np.zeros((kD, kH * W * Cin, W * Cout), np.float32)
    for kh in range(kH):
        for kw in range(kW):
            for wo in range(W):
                wi = wo + kw - 1
                if 0 <= wi < W:
                    r0 = kh * W * Cin + wi * Cin
                    band[:, r0:r0 + Cin, wo * Cout:(wo + 1) * Cout] = w_dhwio_np[:, kh, kw]
    return jnp.asarray(band).astype(dtype)


def residual_block_kernel(x_ref, band0_ref, b0_ref, band1_ref, b1_ref, out_ref, pad_s):
    # x_ref    : (Nb, D, H, WC) f32   un-padded input, (W, C) folded onto the lane axis
    # band*_ref: (3, 3*WC, WC)  bf16  banded conv weights, one per kd tap (kh folded in)
    # b*_ref   : (1, WC)        f32   bias tiled across W
    # out_ref  : (Nb, D, H, WC) f32
    # pad_s    : (Nb, D+2, H+2, WC) f32 scratch: (D, H)-padded activation, reused by both convs
    Nb, D, H, WC = x_ref.shape
    Dp, Hp = D + 2, H + 2
    M = Nb * D * H

    # Zero only the 4 halo faces; the interior is fully overwritten below.
    zface_d = jnp.zeros((Nb, 1, Hp, WC), jnp.float32)
    zface_h = jnp.zeros((Nb, Dp, 1, WC), jnp.float32)
    pad_s[:, 0:1, :, :] = zface_d
    pad_s[:, Dp - 1:Dp, :, :] = zface_d
    pad_s[:, :, 0:1, :] = zface_h
    pad_s[:, :, Hp - 1:Hp, :] = zface_h

    x = x_ref[...]                                          # (Nb, D, H, WC) original values
    pad_s[:, 1:1 + D, 1:1 + H, :] = jnp.maximum(x, 0.0)     # relu(x) into the interior

    def conv3d(band_ref, bias_row):
        # 3 matmuls with K = 3*WC: kh taps, kw taps, channels and W-padding all live
        # inside the banded weights.  Accumulator starts as the broadcast bias.
        acc = jnp.broadcast_to(bias_row, (M, WC)).astype(jnp.float32)
        for kd in range(3):
            slab = jnp.concatenate(
                [pad_s[:, kd:kd + D, kh:kh + H, :].reshape(M, WC).astype(jnp.bfloat16)
                 for kh in range(3)],
                axis=-1)                                     # (M, 3*WC) bf16
            acc = acc + jnp.dot(slab, band_ref[kd],
                                preferred_element_type=jnp.float32)
        return acc

    # conv0( relu(x) ) + b0, then ReLU
    y0 = jnp.maximum(conv3d(band0_ref, b0_ref[...]), 0.0)
    # re-pad intermediate activation into the same scratch (halo is still zero)
    pad_s[:, 1:1 + D, 1:1 + H, :] = y0.reshape(Nb, D, H, WC)
    # conv1( ... ) + b1
    y1 = conv3d(band1_ref, b1_ref[...])
    # residual add with the ORIGINAL (un-activated) input
    out_ref[...] = (y1.reshape(Nb, D, H, WC) + x).astype(out_ref.dtype)


def residual_block_pallas(x_ncdhw, w0, b0, w1, b1):
    """x_ncdhw: (N, C, D, H, W) float32 — PyTorch convention. Returns same shape."""
    N, C, D, H, W = x_ncdhw.shape
    WC = W * C

    # Fold batches into the matmul M dim: largest divisor of N with Nb*D*H <= ~256.
    nb_cap = max(1, 256 // (D * H))
    Nb = max(d for d in range(1, N + 1) if N % d == 0 and d <= nb_cap)
    grid = (N // Nb,)
    # TODO(synk): on v7x prefer an even number of grid steps (2 TensorCores) when N allows.

    # layout glue: channels-last, fold (W, C) onto the lane axis; no host-side padding
    x = jnp.transpose(x_ncdhw, (0, 2, 3, 4, 1)).reshape(N, D, H, WC)

    band0 = _make_banded_weights_np(np.asarray(w0), W)      # (3, 3*WC, WC) bf16
    band1 = _make_banded_weights_np(np.asarray(w1), W)
    b0_row = jnp.tile(jnp.asarray(b0, jnp.float32), W).reshape(1, WC)
    b1_row = jnp.tile(jnp.asarray(b1, jnp.float32), W).reshape(1, WC)

    out = pl.pallas_call(
        residual_block_kernel,
        out_shape=jax.ShapeDtypeStruct((N, D, H, WC), jnp.float32),
        grid=grid,
        in_specs=[
            pl.BlockSpec((Nb, D, H, WC), lambda n: (n, 0, 0, 0)),
            pl.BlockSpec((3, 3 * WC, WC), lambda n: (0, 0, 0)),
            pl.BlockSpec((1, WC), lambda n: (0, 0)),
            pl.BlockSpec((3, 3 * WC, WC), lambda n: (0, 0, 0)),
            pl.BlockSpec((1, WC), lambda n: (0, 0)),
        ],
        out_specs=pl.BlockSpec((Nb, D, H, WC), lambda n: (n, 0, 0, 0)),
        scratch_shapes=[pltpu.VMEM((Nb, D + 2, H + 2, WC), jnp.float32)],
        compiler_params=pltpu.CompilerParams(dimension_semantics=("parallel",)),
    )(x, band0, b0_row, band1, b1_row)

    out = out.reshape(N, D, H, W, C)
    return jnp.transpose(out, (0, 4, 1, 2, 3))               # back to NCDHW


def residual_block_reference(x_ncdhw, w0, b0, w1, b1):
    """Plain-JAX reference mirroring the PyTorch forward (for correctness check)."""
    x = jnp.transpose(x_ncdhw, (0, 2, 3, 4, 1))
    dn = jax.lax.conv_dimension_numbers(x.shape, w0.shape, ("NDHWC", "DHWIO", "NDHWC"))
    h = jax.nn.relu(x)
    h = jax.lax.conv_general_dilated(h, w0, (1, 1, 1), "SAME", dimension_numbers=dn) + b0
    h = jax.nn.relu(h)
    h = jax.lax.conv_general_dilated(h, w1, (1, 1, 1), "SAME", dimension_numbers=dn) + b1
    out = h + x
    return jnp.transpose(out, (0, 4, 1, 2, 3))


if __name__ == "__main__":
    # small shapes consistent with the module; W*C = 128 makes the lane axis dense
    N, C, D, H, W = 2, 8, 4, 8, 16

    key = jax.random.PRNGKey(0)
    kx, kw0, kb0, kw1, kb1 = jax.random.split(key, 5)

    x = jax.random.normal(kx, (N, C, D, H, W), dtype=jnp.float32)
    # deterministic synthetic parameters (Conv3d weights in DHWIO layout)
    w0 = 0.1 * jax.random.normal(kw0, (3, 3, 3, C, C), dtype=jnp.float32)
    b0 = 0.1 * jax.random.normal(kb0, (C,), dtype=jnp.float32)
    w1 = 0.1 * jax.random.normal(kw1, (3, 3, 3, C, C), dtype=jnp.float32)
    b1 = 0.1 * jax.random.normal(kb1, (C,), dtype=jnp.float32)

    out = residual_block_pallas(x, w0, b0, w1, b1)
    out = jax.block_until_ready(out)

    ref = jax.block_until_ready(residual_block_reference(x, w0, b0, w1, b1))
    assert out.shape == (N, C, D, H, W)
    # bf16 MXU inputs (f32 accumulation) -> relaxed tolerance vs. the f32 reference
    np.testing.assert_allclose(np.asarray(out), np.asarray(ref), atol=5e-2, rtol=5e-2)

    print("KERNEL_OK")
</pallas_src>

<mosaic_0001>
module attributes {stable_mosaic.version = 11 : i64} {
  func.func @residual_block_kernel(%arg0: i32, %arg1: memref<2x4x8x128xf32, #tpu.memory_space<vmem>>, %arg2: memref<3x384x128xbf16, #tpu.memory_space<vmem>>, %arg3: memref<1x128xf32, #tpu.memory_space<vmem>>, %arg4: memref<3x384x128xbf16, #tpu.memory_space<vmem>>, %arg5: memref<1x128xf32, #tpu.memory_space<vmem>>, %arg6: memref<2x4x8x128xf32, #tpu.memory_space<vmem>>, %arg7: memref<2x6x10x128xf32, #tpu.memory_space<vmem>>) attributes {dimension_semantics = [#tpu.dimension_semantics<parallel>], iteration_bounds = array<i64: 1>, scalar_prefetch = 0 : i64, scratch_operands = 1 : i64, tpu.core_type = #tpu.core_type<tc>, window_params = [{transform_indices = @transform_0, window_bounds = array<i64: 2, 4, 8, 128>}, {pipeline_mode = #tpu.pipeline_mode<synchronous>, transform_indices = @transform_1, window_bounds = array<i64: 3, 384, 128>}, {pipeline_mode = #tpu.pipeline_mode<synchronous>, transform_indices = @transform_2, window_bounds = array<i64: 1, 128>}, {pipeline_mode = #tpu.pipeline_mode<synchronous>, transform_indices = @transform_3, window_bounds = array<i64: 3, 384, 128>}, {pipeline_mode = #tpu.pipeline_mode<synchronous>, transform_indices = @transform_4, window_bounds = array<i64: 1, 128>}, {transform_indices = @transform_5, window_bounds = array<i64: 2, 4, 8, 128>}]} {
    %cst = arith.constant 0.000000e+00 : f32
    %0 = vector.broadcast %cst : f32 to vector<2x1x10x128xf32>
    %cst_0 = arith.constant 0.000000e+00 : f32
    %1 = vector.broadcast %cst_0 : f32 to vector<2x6x1x128xf32>
    %c0 = arith.constant 0 : index
    %c0_1 = arith.constant 0 : index
    %c0_2 = arith.constant 0 : index
    %c0_3 = arith.constant 0 : index
    %2 = vector.load %arg7[%c0, %c0_1, %c0_2, %c0_3] : memref<2x6x10x128xf32, #tpu.memory_space<vmem>>, vector<2x1x10x128xf32>
    tpu.vector_store %arg7[%c0, %c0_1, %c0_2, %c0_3], %0 {strides = array<i32>} : memref<2x6x10x128xf32, #tpu.memory_space<vmem>>, vector<2x1x10x128xf32>,
    %c0_4 = arith.constant 0 : index
    %c5 = arith.constant 5 : index
    %c0_5 = arith.constant 0 : index
    %c0_6 = arith.constant 0 : index
    %3 = vector.load %arg7[%c0_4, %c5, %c0_5, %c0_6] : memref<2x6x10x128xf32, #tpu.memory_space<vmem>>, vector<2x1x10x128xf32>
    tpu.vector_store %arg7[%c0_4, %c5, %c0_5, %c0_6], %0 {strides = array<i32>} : memref<2x6x10x128xf32, #tpu.memory_space<vmem>>, vector<2x1x10x128xf32>,
    %c0_7 = arith.constant 0 : index
    %c0_8 = arith.constant 0 : index
    %c0_9 = arith.constant 0 : index
    %c0_10 = arith.constant 0 : index
    %4 = vector.load %arg7[%c0_7, %c0_8, %c0_9, %c0_10] : memref<2x6x10x128xf32, #tpu.memory_space<vmem>>, vector<2x6x1x128xf32>
    tpu.vector_store %arg7[%c0_7, %c0_8, %c0_9, %c0_10], %1 {strides = array<i32>} : memref<2x6x10x128xf32, #tpu.memory_space<vmem>>, vector<2x6x1x128xf32>,
    %c0_11 = arith.constant 0 : index
    %c0_12 = arith.constant 0 : index
    %c9 = arith.constant 9 : index
    %c0_13 = arith.constant 0 : index
    %5 = vector.load %arg7[%c0_11, %c0_12, %c9, %c0_13] : memref<2x6x10x128xf32, #tpu.memory_space<vmem>>, vector<2x6x1x128xf32>
    tpu.vector_store %arg7[%c0_11, %c0_12, %c9, %c0_13], %1 {strides = array<i32>} : memref<2x6x10x128xf32, #tpu.memory_space<vmem>>, vector<2x6x1x128xf32>,
    %c0_14 = arith.constant 0 : index
    %c0_15 = arith.constant 0 : index
    %c0_16 = arith.constant 0 : index
    %c0_17 = arith.constant 0 : index
    %6 = vector.load %arg1[%c0_14, %c0_15, %c0_16, %c0_17] : memref<2x4x8x128xf32, #tpu.memory_space<vmem>>, vector<2x4x8x128xf32>
    %cst_18 = arith.constant 0.000000e+00 : f32
    %7 = vector.broadcast %cst_18 : f32 to vector<2x4x8x128xf32>
    %8 = arith.maximumf %6, %7 : vector<2x4x8x128xf32>
    %c0_19 = arith.constant 0 : index
    %c1 = arith.constant 1 : index
    %c1_20 = arith.constant 1 : index
    %c0_21 = arith.constant 0 : index
    %9 = vector.load %arg7[%c0_19, %c1, %c1_20, %c0_21] : memref<2x6x10x128xf32, #tpu.memory_space<vmem>>, vector<2x4x8x128xf32>
    tpu.vector_store %arg7[%c0_19, %c1, %c1_20, %c0_21], %8 {strides = array<i32>} : memref<2x6x10x128xf32, #tpu.memory_space<vmem>>, vector<2x4x8x128xf32>,
    %c0_22 = arith.constant 0 : index
    %c0_23 = arith.constant 0 : index
    %10 = vector.load %arg3[%c0_22, %c0_23] : memref<1x128xf32, #tpu.memory_space<vmem>>, vector<1x128xf32>
    %11 = vector.shape_cast %10 : vector<1x128xf32> to vector<1x128xf32>
    %12 = vector.broadcast %11 : vector<1x128xf32> to vector<64x128xf32>
    %c0_24 = arith.constant 0 : index
    %c0_25 = arith.constant 0 : index
    %c0_26 = arith.constant 0 : index
    %c0_27 = arith.constant 0 : index
    %13 = vector.load %arg7[%c0_24, %c0_25, %c0_26, %c0_27] : memref<2x6x10x128xf32, #tpu.memory_space<vmem>>, vector<2x4x8x128xf32>
    %14 = vector.shape_cast %13 : vector<2x4x8x128xf32> to vector<64x128xf32>
    %15 = arith.truncf %14 : vector<64x128xf32> to vector<64x128xbf16>
    %c0_28 = arith.constant 0 : index
    %c0_29 = arith.constant 0 : index
    %c1_30 = arith.constant 1 : index
    %c0_31 = arith.constant 0 : index
    %16 = vector.load %arg7[%c0_28, %c0_29, %c1_30, %c0_31] : memref<2x6x10x128xf32, #tpu.memory_space<vmem>>, vector<2x4x8x128xf32>
    %17 = vector.shape_cast %16 : vector<2x4x8x128xf32> to vector<64x128xf32>
    %18 = arith.truncf %17 : vector<64x128xf32> to vector<64x128xbf16>
    %c0_32 = arith.constant 0 : index
    %c0_33 = arith.constant 0 : index
    %c2 = arith.constant 2 : index
    %c0_34 = arith.constant 0 : index
    %19 = vector.load %arg7[%c0_32, %c0_33, %c2, %c0_34] : memref<2x6x10x128xf32, #tpu.memory_space<vmem>>, vector<2x4x8x128xf32>
    %20 = vector.shape_cast %19 : vector<2x4x8x128xf32> to vector<64x128xf32>
    %21 = arith.truncf %20 : vector<64x128xf32> to vector<64x128xbf16>
    %22 = tpu.concatenate %15, %18, %21 in 1 : vector<64x128xbf16>, vector<64x128xbf16>, vector<64x128xbf16> -> vector<64x384xbf16>
    %c0_35 = arith.constant 0 : index
    %c0_36 = arith.constant 0 : index
    %c0_37 = arith.constant 0 : index
    %23 = vector.load %arg2[%c0_35, %c0_36, %c0_37] : memref<3x384x128xbf16, #tpu.memory_space<vmem>>, vector<1x384x128xbf16>
    %24 = vector.shape_cast %23 : vector<1x384x128xbf16> to vector<384x128xbf16>
    %cst_38 = arith.constant dense<0.000000e+00> : vector<64x128xf32>
    %25 = tpu.matmul %22, %24, %cst_38 {dimension_numbers = #tpu.dot_dimension_numbers<[1], [0], [0], [1], [0, 0, 1, 1], [], []>} : vector<64x384xbf16>, vector<384x128xbf16>, vector<64x128xf32> -> vector<64x128xf32>
    %26 = arith.addf %12, %25 : vector<64x128xf32>
    %c0_39 = arith.constant 0 : index
    %c1_40 = arith.constant 1 : index
    %c0_41 = arith.constant 0 : index
    %c0_42 = arith.constant 0 : index
    %27 = vector.load %arg7[%c0_39, %c1_40, %c0_41, %c0_42] : memref<2x6x10x128xf32, #tpu.memory_space<vmem>>, vector<2x4x8x128xf32>
    %28 = vector.shape_cast %27 : vector<2x4x8x128xf32> to vector<64x128xf32>
    %29 = arith.truncf %28 : vector<64x128xf32> to vector<64x128xbf16>
    %c0_43 = arith.constant 0 : index
    %c1_44 = arith.constant 1 : index
    %c1_45 = arith.constant 1 : index
    %c0_46 = arith.constant 0 : index
    %30 = vector.load %arg7[%c0_43, %c1_44, %c1_45, %c0_46] : memref<2x6x10x128xf32, #tpu.memory_space<vmem>>, vector<2x4x8x128xf32>
    %31 = vector.shape_cast %30 : vector<2x4x8x128xf32> to vector<64x128xf32>
    %32 = arith.truncf %31 : vector<64x128xf32> to vector<64x128xbf16>
    %c0_47 = arith.constant 0 : index
    %c1_48 = arith.constant 1 : index
    %c2_49 = arith.constant 2 : index
    %c0_50 = arith.constant 0 : index
    %33 = vector.load %arg7[%c0_47, %c1_48, %c2_49, %c0_50] : memref<2x6x10x128xf32, #tpu.memory_space<vmem>>, vector<2x4x8x128xf32>
    %34 = vector.shape_cast %33 : vector<2x4x8x128xf32> to vector<64x128xf32>
    %35 = arith.truncf %34 : vector<64x128xf32> to vector<64x128xbf16>
    %36 = tpu.concatenate %29, %32, %35 in 1 : vector<64x128xbf16>, vector<64x128xbf16>, vector<64x128xbf16> -> vector<64x384xbf16>
    %c1_51 = arith.constant 1 : index
    %c0_52 = arith.constant 0 : index
    %c0_53 = arith.constant 0 : index
    %37 = vector.load %arg2[%c1_51, %c0_52, %c0_53] : memref<3x384x128xbf16, #tpu.memory_space<vmem>>, vector<1x384x128xbf16>
    %38 = vector.shape_cast %37 : vector<1x384x128xbf16> to vector<384x128xbf16>
    %cst_54 = arith.constant dense<0.000000e+00> : vector<64x128xf32>
    %39 = tpu.matmul %36, %38, %cst_54 {dimension_numbers = #tpu.dot_dimension_numbers<[1], [0], [0], [1], [0, 0, 1, 1], [], []>} : vector<64x384xbf16>, vector<384x128xbf16>, vector<64x128xf32> -> vector<64x128xf32>
    %40 = arith.addf %26, %39 : vector<64x128xf32>
    %c0_55 = arith.constant 0 : index
    %c2_56 = arith.constant 2 : index
    %c0_57 = arith.constant 0 : index
    %c0_58 = arith.constant 0 : index
    %41 = vector.load %arg7[%c0_55, %c2_56, %c0_57, %c0_58] : memref<2x6x10x128xf32, #tpu.memory_space<vmem>>, vector<2x4x8x128xf32>
    %42 = vector.shape_cast %41 : vector<2x4x8x128xf32> to vector<64x128xf32>
    %43 = arith.truncf %42 : vector<64x128xf32> to vector<64x128xbf16>
    %c0_59 = arith.constant 0 : index
    %c2_60 = arith.constant 2 : index
    %c1_61 = arith.constant 1 : index
    %c0_62 = arith.constant 0 : index
    %44 = vector.load %arg7[%c0_59, %c2_60, %c1_61, %c0_62] : memref<2x6x10x128xf32, #tpu.memory_space<vmem>>, vector<2x4x8x128xf32>
    %45 = vector.shape_cast %44 : vector<2x4x8x128xf32> to vector<64x128xf32>
    %46 = arith.truncf %45 : vector<64x128xf32> to vector<64x128xbf16>
    %c0_63 = arith.constant 0 : index
    %c2_64 = arith.constant 2 : index
    %c2_65 = arith.constant 2 : index
    %c0_66 = arith.constant 0 : index
    %47 = vector.load %arg7[%c0_63, %c2_64, %c2_65, %c0_66] : memref<2x6x10x128xf32, #tpu.memory_space<vmem>>, vector<2x4x8x128xf32>
    %48 = vector.shape_cast %47 : vector<2x4x8x128xf32> to vector<64x128xf32>
    %49 = arith.truncf %48 : vector<64x128xf32> to vector<64x128xbf16>
    %50 = tpu.concatenate %43, %46, %49 in 1 : vector<64x128xbf16>, vector<64x128xbf16>, vector<64x128xbf16> -> vector<64x384xbf16>
    %c2_67 = arith.constant 2 : index
    %c0_68 = arith.constant 0 : index
    %c0_69 = arith.constant 0 : index
    %51 = vector.load %arg2[%c2_67, %c0_68, %c0_69] : memref<3x384x128xbf16, #tpu.memory_space<vmem>>, vector<1x384x128xbf16>
    %52 = vector.shape_cast %51 : vector<1x384x128xbf16> to vector<384x128xbf16>
    %cst_70 = arith.constant dense<0.000000e+00> : vector<64x128xf32>
    %53 = tpu.matmul %50, %52, %cst_70 {dimension_numbers = #tpu.dot_dimension_numbers<[1], [0], [0], [1], [0, 0, 1, 1], [], []>} : vector<64x384xbf16>, vector<384x128xbf16>, vector<64x128xf32> -> vector<64x128xf32>
    %54 = arith.addf %40, %53 : vector<64x128xf32>
    %cst_71 = arith.constant 0.000000e+00 : f32
    %55 = vector.broadcast %cst_71 : f32 to vector<64x128xf32>
    %56 = arith.maximumf %54, %55 : vector<64x128xf32>
    %57 = vector.shape_cast %56 : vector<64x128xf32> to vector<2x4x8x128xf32>
    %c0_72 = arith.constant 0 : index
    %c1_73 = arith.constant 1 : index
    %c1_74 = arith.constant 1 : index
    %c0_75 = arith.constant 0 : index
    %58 = vector.load %arg7[%c0_72, %c1_73, %c1_74, %c0_75] : memref<2x6x10x128xf32, #tpu.memory_space<vmem>>, vector<2x4x8x128xf32>
    tpu.vector_store %arg7[%c0_72, %c1_73, %c1_74, %c0_75], %57 {strides = array<i32>} : memref<2x6x10x128xf32, #tpu.memory_space<vmem>>, vector<2x4x8x128xf32>,
    %c0_76 = arith.constant 0 : index
    %c0_77 = arith.constant 0 : index
    %59 = vector.load %arg5[%c0_76, %c0_77] : memref<1x128xf32, #tpu.memory_space<vmem>>, vector<1x128xf32>
    %60 = vector.shape_cast %59 : vector<1x128xf32> to vector<1x128xf32>
    %61 = vector.broadcast %60 : vector<1x128xf32> to vector<64x128xf32>
    %c0_78 = arith.constant 0 : index
    %c0_79 = arith.constant 0 : index
    %c0_80 = arith.constant 0 : index
    %c0_81 = arith.constant 0 : index
    %62 = vector.load %arg7[%c0_78, %c0_79, %c0_80, %c0_81] : memref<2x6x10x128xf32, #tpu.memory_space<vmem>>, vector<2x4x8x128xf32>
    %63 = vector.shape_cast %62 : vector<2x4x8x128xf32> to vector<64x128xf32>
    %64 = arith.truncf %63 : vector<64x128xf32> to vector<64x128xbf16>
    %c0_82 = arith.constant 0 : index
    %c0_83 = arith.constant 0 : index
    %c1_84 = arith.constant 1 : index
    %c0_85 = arith.constant 0 : index
    %65 = vector.load %arg7[%c0_82, %c0_83, %c1_84, %c0_85] : memref<2x6x10x128xf32, #tpu.memory_space<vmem>>, vector<2x4x8x128xf32>
    %66 = vector.shape_cast %65 : vector<2x4x8x128xf32> to vector<64x128xf32>
    %67 = arith.truncf %66 : vector<64x128xf32> to vector<64x128xbf16>
    %c0_86 = arith.constant 0 : index
    %c0_87 = arith.constant 0 : index
    %c2_88 = arith.constant 2 : index
    %c0_89 = arith.constant 0 : index
    %68 = vector.load %arg7[%c0_86, %c0_87, %c2_88, %c0_89] : memref<2x6x10x128xf32, #tpu.memory_space<vmem>>, vector<2x4x8x128xf32>
    %69 = vector.shape_cast %68 : vector<2x4x8x128xf32> to vector<64x128xf32>
    %70 = arith.truncf %69 : vector<64x128xf32> to vector<64x128xbf16>
    %71 = tpu.concatenate %64, %67, %70 in 1 : vector<64x128xbf16>, vector<64x128xbf16>, vector<64x128xbf16> -> vector<64x384xbf16>
    %c0_90 = arith.constant 0 : index
    %c0_91 = arith.constant 0 : index
    %c0_92 = arith.constant 0 : index
    %72 = vector.load %arg4[%c0_90, %c0_91, %c0_92] : memref<3x384x128xbf16, #tpu.memory_space<vmem>>, vector<1x384x128xbf16>
    %73 = vector.shape_cast %72 : vector<1x384x128xbf16> to vector<384x128xbf16>
    %cst_93 = arith.constant dense<0.000000e+00> : vector<64x128xf32>
    %74 = tpu.matmul %71, %73, %cst_93 {dimension_numbers = #tpu.dot_dimension_numbers<[1], [0], [0], [1], [0, 0, 1, 1], [], []>} : vector<64x384xbf16>, vector<384x128xbf16>, vector<64x128xf32> -> vector<64x128xf32>
    %75 = arith.addf %61, %74 : vector<64x128xf32>
    %c0_94 = arith.constant 0 : index
    %c1_95 = arith.constant 1 : index
    %c0_96 = arith.constant 0 : index
    %c0_97 = arith.constant 0 : index
    %76 = vector.load %arg7[%c0_94, %c1_95, %c0_96, %c0_97] : memref<2x6x10x128xf32, #tpu.memory_space<vmem>>, vector<2x4x8x128xf32>
    %77 = vector.shape_cast %76 : vector<2x4x8x128xf32> to vector<64x128xf32>
    %78 = arith.truncf %77 : vector<64x128xf32> to vector<64x128xbf16>
    %c0_98 = arith.constant 0 : index
    %c1_99 = arith.constant 1 : index
    %c1_100 = arith.constant 1 : index
    %c0_101 = arith.constant 0 : index
    %79 = vector.load %arg7[%c0_98, %c1_99, %c1_100, %c0_101] : memref<2x6x10x128xf32, #tpu.memory_space<vmem>>, vector<2x4x8x128xf32>
    %80 = vector.shape_cast %79 : vector<2x4x8x128xf32> to vector<64x128xf32>
    %81 = arith.truncf %80 : vector<64x128xf32> to vector<64x128xbf16>
    %c0_102 = arith.constant 0 : index
    %c1_103 = arith.constant 1 : index
    %c2_104 = arith.constant 2 : index
    %c0_105 = arith.constant 0 : index
    %82 = vector.load %arg7[%c0_102, %c1_103, %c2_104, %c0_105] : memref<2x6x10x128xf32, #tpu.memory_space<vmem>>, vector<2x4x8x128xf32>
    %83 = vector.shape_cast %82 : vector<2x4x8x128xf32> to vector<64x128xf32>
    %84 = arith.truncf %83 : vector<64x128xf32> to vector<64x128xbf16>
    %85 = tpu.concatenate %78, %81, %84 in 1 : vector<64x128xbf16>, vector<64x128xbf16>, vector<64x128xbf16> -> vector<64x384xbf16>
    %c1_106 = arith.constant 1 : index
    %c0_107 = arith.constant 0 : index
    %c0_108 = arith.constant 0 : index
    %86 = vector.load %arg4[%c1_106, %c0_107, %c0_108] : memref<3x384x128xbf16, #tpu.memory_space<vmem>>, vector<1x384x128xbf16>
    %87 = vector.shape_cast %86 : vector<1x384x128xbf16> to vector<384x128xbf16>
    %cst_109 = arith.constant dense<0.000000e+00> : vector<64x128xf32>
    %88 = tpu.matmul %85, %87, %cst_109 {dimension_numbers = #tpu.dot_dimension_numbers<[1], [0], [0], [1], [0, 0, 1, 1], [], []>} : vector<64x384xbf16>, vector<384x128xbf16>, vector<64x128xf32> -> vector<64x128xf32>
    %89 = arith.addf %75, %88 : vector<64x128xf32>
    %c0_110 = arith.constant 0 : index
    %c2_111 = arith.constant 2 : index
    %c0_112 = arith.constant 0 : index
    %c0_113 = arith.constant 0 : index
    %90 = vector.load %arg7[%c0_110, %c2_111, %c0_112, %c0_113] : memref<2x6x10x128xf32, #tpu.memory_space<vmem>>, vector<2x4x8x128xf32>
    %91 = vector.shape_cast %90 : vector<2x4x8x128xf32> to vector<64x128xf32>
    %92 = arith.truncf %91 : vector<64x128xf32> to vector<64x128xbf16>
    %c0_114 = arith.constant 0 : index
    %c2_115 = arith.constant 2 : index
    %c1_116 = arith.constant 1 : index
    %c0_117 = arith.constant 0 : index
    %93 = vector.load %arg7[%c0_114, %c2_115, %c1_116, %c0_117] : memref<2x6x10x128xf32, #tpu.memory_space<vmem>>, vector<2x4x8x128xf32>
    %94 = vector.shape_cast %93 : vector<2x4x8x128xf32> to vector<64x128xf32>
    %95 = arith.truncf %94 : vector<64x128xf32> to vector<64x128xbf16>
    %c0_118 = arith.constant 0 : index
    %c2_119 = arith.constant 2 : index
    %c2_120 = arith.constant 2 : index
    %c0_121 = arith.constant 0 : index
    %96 = vector.load %arg7[%c0_118, %c2_119, %c2_120, %c0_121] : memref<2x6x10x128xf32, #tpu.memory_space<vmem>>, vector<2x4x8x128xf32>
    %97 = vector.shape_cast %96 : vector<2x4x8x128xf32> to vector<64x128xf32>
    %98 = arith.truncf %97 : vector<64x128xf32> to vector<64x128xbf16>
    %99 = tpu.concatenate %92, %95, %98 in 1 : vector<64x128xbf16>, vector<64x128xbf16>, vector<64x128xbf16> -> vector<64x384xbf16>
    %c2_122 = arith.constant 2 : index
    %c0_123 = arith.constant 0 : index
    %c0_124 = arith.constant 0 : index
    %100 = vector.load %arg4[%c2_122, %c0_123, %c0_124] : memref<3x384x128xbf16, #tpu.memory_space<vmem>>, vector<1x384x128xbf16>
    %101 = vector.shape_cast %100 : vector<1x384x128xbf16> to vector<384x128xbf16>
    %cst_125 = arith.constant dense<0.000000e+00> : vector<64x128xf32>
    %102 = tpu.matmul %99, %101, %cst_125 {dimension_numbers = #tpu.dot_dimension_numbers<[1], [0], [0], [1], [0, 0, 1, 1], [], []>} : vector<64x384xbf16>, vector<384x128xbf16>, vector<64x128xf32> -> vector<64x128xf32>
    %103 = arith.addf %89, %102 : vector<64x128xf32>
    %104 = vector.shape_cast %103 : vector<64x128xf32> to vector<2x4x8x128xf32>
    %105 = arith.addf %104, %6 : vector<2x4x8x128xf32>
    %c0_126 = arith.constant 0 : index
    %c0_127 = arith.constant 0 : index
    %c0_128 = arith.constant 0 : index
    %c0_129 = arith.constant 0 : index
    %106 = vector.load %arg6[%c0_126, %c0_127, %c0_128, %c0_129] : memref<2x4x8x128xf32, #tpu.memory_space<vmem>>, vector<2x4x8x128xf32>
    tpu.vector_store %arg6[%c0_126, %c0_127, %c0_128, %c0_129], %105 {strides = array<i32>} : memref<2x4x8x128xf32, #tpu.memory_space<vmem>>, vector<2x4x8x128xf32>,
    return
  }
  func.func @transform_0(%arg0: i32) -> (i32, i32, i32, i32) {
    %c0_i32 = arith.constant 0 : i32
    %c0_i32_0 = arith.constant 0 : i32
    %c0_i32_1 = arith.constant 0 : i32
    %c0_i32_2 = arith.constant 0 : i32
    return %arg0, %c0_i32, %c0_i32_0, %c0_i32_1 : i32, i32, i32, i32
  }
  func.func @transform_1(%arg0: i32) -> (i32, i32, i32) {
    %c0_i32 = arith.constant 0 : i32
    %c0_i32_0 = arith.constant 0 : i32
    %c0_i32_1 = arith.constant 0 : i32
    %c0_i32_2 = arith.constant 0 : i32
    return %c0_i32, %c0_i32_0, %c0_i32_1 : i32, i32, i32
  }
  func.func @transform_2(%arg0: i32) -> (i32, i32) {
    %c0_i32 = arith.constant 0 : i32
    %c0_i32_0 = arith.constant 0 : i32
    %c0_i32_1 = arith.constant 0 : i32
    return %c0_i32, %c0_i32_0 : i32, i32
  }
  func.func @transform_3(%arg0: i32) -> (i32, i32, i32) {
    %c0_i32 = arith.constant 0 : i32
    %c0_i32_0 = arith.constant 0 : i32
    %c0_i32_1 = arith.constant 0 : i32
    %c0_i32_2 = arith.constant 0 : i32
    return %c0_i32, %c0_i32_0, %c0_i32_1 : i32, i32, i32
  }
  func.func @transform_4(%arg0: i32) -> (i32, i32) {
    %c0_i32 = arith.constant 0 : i32
    %c0_i32_0 = arith.constant 0 : i32
    %c0_i32_1 = arith.constant 0 : i32
    return %c0_i32, %c0_i32_0 : i32, i32
  }
  func.func @transform_5(%arg0: i32) -> (i32, i32, i32, i32) {
    %c0_i32 = arith.constant 0 : i32
    %c0_i32_0 = arith.constant 0 : i32
    %c0_i32_1 = arith.constant 0 : i32
    %c0_i32_2 = arith.constant 0 : i32
    return %arg0, %c0_i32, %c0_i32_0, %c0_i32_1 : i32, i32, i32, i32
  }
}

</mosaic_0001>

<llo_original>
// kernel: tpu_custom_call.1
$region0: #{tpu_custom_call.1}
  #allocation0 [shape = 'u32[]', space=smem, size = 0x4, offset = 0x4, fixed_abs, tag = 'smem constant byte address 0x4 - core index']
  #allocation1 [shape = 'u32[72,128]{1,0:T(1,128)}', space=vmem, size = 0x9000, scoped, tag = 'internal scratch']
  #allocation2 [shape = 'f32[2,6,10,128]{3,2,1,0:T(8,128)}', space=vmem, size = 0x18000, scoped, tag = 'scratch operand']
  %s0 = inlined_call_operand.hbm [shape: f32[2,4,8,128], index: 0, kind: input, shape index: {}]
  %s1 = inlined_call_operand.hbm [shape: bf16[3,384,128], index: 1, kind: input, shape index: {}]
  %s2 = inlined_call_operand.vmem [shape: f32[1,128], index: 2, kind: input, shape index: {}]
  %s3 = inlined_call_operand.hbm [shape: bf16[3,384,128], index: 3, kind: input, shape index: {}]
  %s4 = inlined_call_operand.vmem [shape: f32[1,128], index: 4, kind: input, shape index: {}]
  %s5 = inlined_call_operand.hbm [shape: f32[2,4,8,128], index: 5, kind: output, shape index: {}]
  %s6 = sld [smem:[#allocation0]]
  $region42: #{tpu_custom_call.1} parent=0
    _
  %s8 = ssub.s32 1, %s6
  %s9 = scalar_select 0, %s8, %s6
  $region1: #{tpu_custom_call.1} parent=0
    #allocation3 [shape = 'u8[32768]{0}', space=vmem, size = 0x8000, scoped, tag = 'input window, operand 0, single buffered']
    #allocation4 [shape = 's32[1]{0}', space=sflag, size = 0x4, scoped, tag = 'scoped memory for tpu_custom_call.1']
    #allocation5 [shape = 's32[1]{0}', space=sflag, size = 0x4, scoped, tag = 'scoped memory for tpu_custom_call.1']
    #allocation6 [shape = 'u8[294912]{0}', space=vmem, size = 0x48000, scoped, tag = 'input window, operand 1, single buffered']
    #allocation7 [shape = 's32[1]{0}', space=sflag, size = 0x4, scoped, tag = 'scoped memory for tpu_custom_call.1']
    #allocation8 [shape = 'u8[294912]{0}', space=vmem, size = 0x48000, scoped, tag = 'input window, operand 3, single buffered']
    #allocation9 [shape = 'u8[32768]{0}', space=vmem, size = 0x8000, scoped, tag = 'output window, operand 0, single buffered']
    %10 = vsyncpa [#allocation4], 0
    %11 = vsyncpa [#allocation7], 0
    %12 = vsyncpa [#allocation5], 0
    // Predicated region
    $region2: #{tpu_custom_call.1} parent=1 // pred_check
      _
    $region3: #{tpu_custom_call.1} parent=1 // pred_check_branch
      %14 = sbr.rel (0) target = $region5
    $region4: #{tpu_custom_call.1} parent=1 // pred_region
      %16 = vsyncadd [#allocation4], 0
      %s17 = sshll.u32 %s0, 4
      %s18 = int_to_ptr.hbm [resolvable:$true] %s17
      %s19 = sshll.u32 [#allocation3], 4
      %s20 = int_to_ptr.vmem [resolvable:$true] %s19
      %25 = dma.hbm_to_vmem [thread:$0]  %s18, 1024, %s20, [#allocation4], 128, 128, 8
    $region5: #{tpu_custom_call.1} parent=1 // pred_fallthru
      _
    // Predicated region
    $region6: #{tpu_custom_call.1} parent=1 // pred_check
      _
    $region7: #{tpu_custom_call.1} parent=1 // pred_check_branch
      %27 = sbr.rel (0) target = $region9
    $region8: #{tpu_custom_call.1} parent=1 // pred_region
      %29 = vsyncadd [#allocation7], 0
      %s30 = sshll.u32 %s1, 4
      %s31 = int_to_ptr.hbm [resolvable:$true] %s30
      %s32 = sshll.u32 [#allocation6], 4
      %s33 = int_to_ptr.vmem [resolvable:$true] %s32
      %38 = dma.hbm_to_vmem [thread:$0]  %s31, 9216, %s33, [#allocation7], 64, 64, 4
    $region9: #{tpu_custom_call.1} parent=1 // pred_fallthru
      _
    // Predicated region
    $region10: #{tpu_custom_call.1} parent=1 // pred_check
      _
    $region11: #{tpu_custom_call.1} parent=1 // pred_check_branch
      %40 = sbr.rel (0) target = $region13
    $region12: #{tpu_custom_call.1} parent=1 // pred_region
      _
    $region13: #{tpu_custom_call.1} parent=1 // pred_fallthru
      _
    // Predicated region
    $region14: #{tpu_custom_call.1} parent=1 // pred_check
      _
    $region15: #{tpu_custom_call.1} parent=1 // pred_check_branch
      %42 = sbr.rel (0) target = $region17
    $region16: #{tpu_custom_call.1} parent=1 // pred_region
      %44 = vsyncadd [#allocation7], 0
      %s45 = sshll.u32 %s3, 4
      %s46 = int_to_ptr.hbm [resolvable:$true] %s45
      %s47 = sshll.u32 [#allocation8], 4
      %s48 = int_to_ptr.vmem [resolvable:$true] %s47
      %53 = dma.hbm_to_vmem [thread:$0]  %s46, 9216, %s48, [#allocation7], 64, 64, 4
    $region17: #{tpu_custom_call.1} parent=1 // pred_fallthru
      _
    // Predicated region
    $region18: #{tpu_custom_call.1} parent=1 // pred_check
      _
    $region19: #{tpu_custom_call.1} parent=1 // pred_check_branch
      %55 = sbr.rel (0) target = $region21
    $region20: #{tpu_custom_call.1} parent=1 // pred_region
      _
    $region21: #{tpu_custom_call.1} parent=1 // pred_fallthru
      _
    // Predicated region
    $region22: #{tpu_custom_call.1} parent=1 // pred_check
      _
    $region23: #{tpu_custom_call.1} parent=1 // pred_check_branch
      %57 = sbr.rel (0) target = $region25
    $region24: #{tpu_custom_call.1} parent=1 // pred_region
      %59 = dma.done [#allocation4], 1024
    $region25: #{tpu_custom_call.1} parent=1 // pred_fallthru
      _
    // Predicated region
    $region26: #{tpu_custom_call.1} parent=1 // pred_check
      _
    $region27: #{tpu_custom_call.1} parent=1 // pred_check_branch
      %61 = sbr.rel (0) target = $region29
    $region28: #{tpu_custom_call.1} parent=1 // pred_region
      %63 = dma.done [#allocation7], 9216
    $region29: #{tpu_custom_call.1} parent=1 // pred_fallthru
      _
    // Predicated region
    $region30: #{tpu_custom_call.1} parent=1 // pred_check
      _
    $region31: #{tpu_custom_call.1} parent=1 // pred_check_branch
      %65 = sbr.rel (0) target = $region33
    $region32: #{tpu_custom_call.1} parent=1 // pred_region
      %67 = dma.done [#allocation7], 9216
    $region33: #{tpu_custom_call.1} parent=1 // pred_fallthru
      _
    %68 = vst [vmem:[#allocation2] sm:$0xff] 0.0
    %69 = vst [vmem:[#allocation2 + $0x8] sm:$0x3] 0.0
    %70 = vst [vmem:[#allocation2 + $0x60] sm:$0xff] 0.0
    %71 = vst [vmem:[#allocation2 + $0x68] sm:$0x3] 0.0
    %s72 = scalar_lea.vmem [#allocation2], 80
    %73 = vst [vmem:[%s72] sm:$0xff] 0.0
    %74 = vst [vmem:[%s72 + $0x8] sm:$0x3] 0.0
    %75 = vst [vmem:[%s72 + $0x60] sm:$0xff] 0.0
    %76 = vst [vmem:[%s72 + $0x68] sm:$0x3] 0.0
    %77 = vst [vmem:[#allocation2] sm:$0x1] 0.0
    %78 = vst [vmem:[#allocation2 + $0x10] sm:$0x1] 0.0
    %79 = vst [vmem:[#allocation2 + $0x20] sm:$0x1] 0.0
    %80 = vst [vmem:[#allocation2 + $0x30] sm:$0x1] 0.0
    %81 = vst [vmem:[#allocation2 + $0x40] sm:$0x1] 0.0
    %82 = vst [vmem:[#allocation2 + $0x50] sm:$0x1] 0.0
    %83 = vst [vmem:[#allocation2 + $0x60] sm:$0x1] 0.0
    %84 = vst [vmem:[#allocation2 + $0x70] sm:$0x1] 0.0
    %85 = vst [vmem:[#allocation2 + $0x80] sm:$0x1] 0.0
    %86 = vst [vmem:[#allocation2 + $0x90] sm:$0x1] 0.0
    %87 = vst [vmem:[#allocation2 + $0xa0] sm:$0x1] 0.0
    %88 = vst [vmem:[#allocation2 + $0xb0] sm:$0x1] 0.0
    %89 = vst [vmem:[#allocation2 + $0x9] sm:$0x1] 0.0
    %90 = vst [vmem:[#allocation2 + $0x19] sm:$0x1] 0.0
    %91 = vst [vmem:[#allocation2 + $0x29] sm:$0x1] 0.0
    %92 = vst [vmem:[#allocation2 + $0x39] sm:$0x1] 0.0
    %93 = vst [vmem:[#allocation2 + $0x49] sm:$0x1] 0.0
    %94 = vst [vmem:[#allocation2 + $0x59] sm:$0x1] 0.0
    %95 = vst [vmem:[#allocation2 + $0x69] sm:$0x1] 0.0
    %96 = vst [vmem:[#allocation2 + $0x79] sm:$0x1] 0.0
    %97 = vst [vmem:[#allocation2 + $0x89] sm:$0x1] 0.0
    %98 = vst [vmem:[#allocation2 + $0x99] sm:$0x1] 0.0
    %99 = vst [vmem:[#allocation2 + $0xa9] sm:$0x1] 0.0
    %100 = vst [vmem:[#allocation2 + $0xb9] sm:$0x1] 0.0
    %v101 = vld [vmem:[#allocation3] sm:$0xff]
    %v102 = vld [vmem:[#allocation3 + $0x8] sm:$0xff]
    %v103 = vld [vmem:[#allocation3 + $0x10] sm:$0xff]
    %v104 = vld [vmem:[#allocation3 + $0x18] sm:$0xff]
    %v105 = vld [vmem:[#allocation3 + $0x20] sm:$0xff]
    %v106 = vld [vmem:[#allocation3 + $0x28] sm:$0xff]
    %v107 = vld [vmem:[#allocation3 + $0x30] sm:$0xff]
    %v108 = vld [vmem:[#allocation3 + $0x38] sm:$0xff]
    %v109 = vmax.f32 %v101, 0.0
    %v110 = vmax.f32 %v102, 0.0
    %v111 = vmax.f32 %v103, 0.0
    %v112 = vmax.f32 %v104, 0.0
    %v113 = vmax.f32 %v105, 0.0
    %v114 = vmax.f32 %v106, 0.0
    %v115 = vmax.f32 %v107, 0.0
    %v116 = vmax.f32 %v108, 0.0
    %s117 = scalar_lea.vmem [#allocation2], 16
    %118 = vst [vmem:[%s117 + $0x1] sm:$0xff] %v109
    %119 = vst [vmem:[%s117 + $0x11] sm:$0xff] %v110
    %120 = vst [vmem:[%s117 + $0x21] sm:$0xff] %v111
    %121 = vst [vmem:[%s117 + $0x31] sm:$0xff] %v112
    %122 = vst [vmem:[%s117 + $0x61] sm:$0xff] %v113
    %123 = vst [vmem:[%s117 + $0x71] sm:$0xff] %v114
    %124 = vst [vmem:[%s117 + $0x81] sm:$0xff] %v115
    %125 = vst [vmem:[%s117 + $0x91] sm:$0xff] %v116
    %v126 = vld [vmem:[%s2] sm:$0x1]
    %v128 = vperm.slane %v126, 0
    %v130 = vld [vmem:[#allocation2] sm:$0xff]
    %v131 = vld [vmem:[#allocation2 + $0x10] sm:$0xff]
    %v132 = vld [vmem:[#allocation2 + $0x20] sm:$0xff]
    %v133 = vld [vmem:[#allocation2 + $0x30] sm:$0xff]
    %v134 = vld [vmem:[#allocation2 + $0x60] sm:$0xff]
    %v135 = vld [vmem:[#allocation2 + $0x70] sm:$0xff]
    %v136 = vld [vmem:[#allocation2 + $0x80] sm:$0xff]
    %v137 = vld [vmem:[#allocation2 + $0x90] sm:$0xff]
    %v138 = vpack.c.bf16 %v130, %v130
    %v139 = vpack.c.bf16 %v131, %v131
    %v140 = vpack.c.bf16 %v132, %v132
    %v141 = vpack.c.bf16 %v133, %v133
    %v142 = vpack.c.bf16 %v134, %v134
    %v143 = vpack.c.bf16 %v135, %v135
    %v144 = vpack.c.bf16 %v136, %v136
    %v145 = vpack.c.bf16 %v137, %v137
    %v146 = vld [vmem:[#allocation2 + $0x1] sm:$0xff]
    %v147 = vld [vmem:[#allocation2 + $0x11] sm:$0xff]
    %v148 = vld [vmem:[#allocation2 + $0x21] sm:$0xff]
    %v149 = vld [vmem:[#allocation2 + $0x31] sm:$0xff]
    %v150 = vld [vmem:[#allocation2 + $0x61] sm:$0xff]
    %v151 = vld [vmem:[#allocation2 + $0x71] sm:$0xff]
    %v152 = vld [vmem:[#allocation2 + $0x81] sm:$0xff]
    %v153 = vld [vmem:[#allocation2 + $0x91] sm:$0xff]
    %v154 = vpack.c.bf16 %v146, %v146
    %v155 = vpack.c.bf16 %v147, %v147
    %v156 = vpack.c.bf16 %v148, %v148
    %v157 = vpack.c.bf16 %v149, %v149
    %v158 = vpack.c.bf16 %v150, %v150
    %v159 = vpack.c.bf16 %v151, %v151
    %v160 = vpack.c.bf16 %v152, %v152
    %v161 = vpack.c.bf16 %v153, %v153
    %v162 = vld [vmem:[#allocation2 + $0x2] sm:$0xff]
    %v163 = vld [vmem:[#allocation2 + $0x12] sm:$0xff]
    %v164 = vld [vmem:[#allocation2 + $0x22] sm:$0xff]
    %v165 = vld [vmem:[#allocation2 + $0x32] sm:$0xff]
    %v166 = vld [vmem:[#allocation2 + $0x62] sm:$0xff]
    %v167 = vld [vmem:[#allocation2 + $0x72] sm:$0xff]
    %v168 = vld [vmem:[#allocation2 + $0x82] sm:$0xff]
    %v169 = vld [vmem:[#allocation2 + $0x92] sm:$0xff]
    %v170 = vpack.c.bf16 %v162, %v162
    %v171 = vpack.c.bf16 %v163, %v163
    %v172 = vpack.c.bf16 %v164, %v164
    %v173 = vpack.c.bf16 %v165, %v165
    %v174 = vpack.c.bf16 %v166, %v166
    %v175 = vpack.c.bf16 %v167, %v167
    %v176 = vpack.c.bf16 %v168, %v168
    %v177 = vpack.c.bf16 %v169, %v169
    %v186 = vunpack.c.l.b16 %v138
    %v187 = vunpack.c.l.b16 %v139
    %v188 = vunpack.c.l.b16 %v140
    %v189 = vunpack.c.l.b16 %v141
    %v190 = vunpack.c.l.b16 %v142
    %v191 = vunpack.c.l.b16 %v143
    %v192 = vunpack.c.l.b16 %v144
    %v193 = vunpack.c.l.b16 %v145
    %v194 = vpack.c.b16 %v187, %v186
    %v195 = vpack.c.b16 %v189, %v188
    %v196 = vpack.c.b16 %v191, %v190
    %v197 = vpack.c.b16 %v193, %v192
    %v210 = vunpack.c.l.b16 %v154
    %v211 = vunpack.c.l.b16 %v155
    %v212 = vunpack.c.l.b16 %v156
    %v213 = vunpack.c.l.b16 %v157
    %v214 = vunpack.c.l.b16 %v158
    %v215 = vunpack.c.l.b16 %v159
    %v216 = vunpack.c.l.b16 %v160
    %v217 = vunpack.c.l.b16 %v161
    %v218 = vpack.c.b16 %v211, %v210
    %v219 = vpack.c.b16 %v213, %v212
    %v220 = vpack.c.b16 %v215, %v214
    %v221 = vpack.c.b16 %v217, %v216
    %v234 = vunpack.c.l.b16 %v170
    %v235 = vunpack.c.l.b16 %v171
    %v236 = vunpack.c.l.b16 %v172
    %v237 = vunpack.c.l.b16 %v173
    %v238 = vunpack.c.l.b16 %v174
    %v239 = vunpack.c.l.b16 %v175
    %v240 = vunpack.c.l.b16 %v176
    %v241 = vunpack.c.l.b16 %v177
    %v242 = vpack.c.b16 %v235, %v234
    %v243 = vpack.c.b16 %v237, %v236
    %v244 = vpack.c.b16 %v239, %v238
    %v245 = vpack.c.b16 %v241, %v240
    %v250 = vld [vmem:[#allocation6] sm:$0xf]
    %v251 = vld [vmem:[#allocation6 + $0x4] sm:$0xf]
    %v252 = vld [vmem:[#allocation6 + $0x8] sm:$0xf]
    %v253 = vld [vmem:[#allocation6 + $0xc] sm:$0xf]
    %v254 = vld [vmem:[#allocation6 + $0x10] sm:$0xf]
    %v255 = vld [vmem:[#allocation6 + $0x14] sm:$0xf]
    %v256 = vld [vmem:[#allocation6 + $0x18] sm:$0xf]
    %v257 = vld [vmem:[#allocation6 + $0x1c] sm:$0xf]
    %v258 = vld [vmem:[#allocation6 + $0x20] sm:$0xf]
    %v259 = vld [vmem:[#allocation6 + $0x24] sm:$0xf]
    %v260 = vld [vmem:[#allocation6 + $0x28] sm:$0xf]
    %v261 = vld [vmem:[#allocation6 + $0x2c] sm:$0xf]
    %v262 = vld [vmem:[#allocation6 + $0x30] sm:$0xf]
    %v263 = vld [vmem:[#allocation6 + $0x34] sm:$0xf]
    %v264 = vld [vmem:[#allocation6 + $0x38] sm:$0xf]
    %v265 = vld [vmem:[#allocation6 + $0x3c] sm:$0xf]
    %v266 = vld [vmem:[#allocation6 + $0x40] sm:$0xf]
    %v267 = vld [vmem:[#allocation6 + $0x44] sm:$0xf]
    %v268 = vld [vmem:[#allocation6 + $0x48] sm:$0xf]
    %v269 = vld [vmem:[#allocation6 + $0x4c] sm:$0xf]
    %v270 = vld [vmem:[#allocation6 + $0x50] sm:$0xf]
    %v271 = vld [vmem:[#allocation6 + $0x54] sm:$0xf]
    %v272 = vld [vmem:[#allocation6 + $0x58] sm:$0xf]
    %v273 = vld [vmem:[#allocation6 + $0x5c] sm:$0xf]
    %v274 = vld [vmem:[#allocation6 + $0x60] sm:$0xf]
    %v275 = vld [vmem:[#allocation6 + $0x64] sm:$0xf]
    %v276 = vld [vmem:[#allocation6 + $0x68] sm:$0xf]
    %v277 = vld [vmem:[#allocation6 + $0x6c] sm:$0xf]
    %v278 = vld [vmem:[#allocation6 + $0x70] sm:$0xf]
    %v279 = vld [vmem:[#allocation6 + $0x74] sm:$0xf]
    %v280 = vld [vmem:[#allocation6 + $0x78] sm:$0xf]
    %v281 = vld [vmem:[#allocation6 + $0x7c] sm:$0xf]
    %v282 = vld [vmem:[#allocation6 + $0x80] sm:$0xf]
    %v283 = vld [vmem:[#allocation6 + $0x84] sm:$0xf]
    %v284 = vld [vmem:[#allocation6 + $0x88] sm:$0xf]
    %v285 = vld [vmem:[#allocation6 + $0x8c] sm:$0xf]
    %v286 = vld [vmem:[#allocation6 + $0x90] sm:$0xf]
    %v287 = vld [vmem:[#allocation6 + $0x94] sm:$0xf]
    %v288 = vld [vmem:[#allocation6 + $0x98] sm:$0xf]
    %v289 = vld [vmem:[#allocation6 + $0x9c] sm:$0xf]
    %v290 = vld [vmem:[#allocation6 + $0xa0] sm:$0xf]
    %v291 = vld [vmem:[#allocation6 + $0xa4] sm:$0xf]
    %v292 = vld [vmem:[#allocation6 + $0xa8] sm:$0xf]
    %v293 = vld [vmem:[#allocation6 + $0xac] sm:$0xf]
    %v294 = vld [vmem:[#allocation6 + $0xb0] sm:$0xf]
    %v295 = vld [vmem:[#allocation6 + $0xb4] sm:$0xf]
    %v296 = vld [vmem:[#allocation6 + $0xb8] sm:$0xf]
    %v297 = vld [vmem:[#allocation6 + $0xbc] sm:$0xf]
    %v346 = vunpack.c.l.b16 %v250
    %v347 = vunpack.c.l.b16 %v251
    %v348 = vunpack.c.l.b16 %v252
    %v349 = vunpack.c.l.b16 %v253
    %v350 = vunpack.c.l.b16 %v254
    %v351 = vunpack.c.l.b16 %v255
    %v352 = vunpack.c.l.b16 %v256
    %v353 = vunpack.c.l.b16 %v257
    %v354 = vunpack.c.l.b16 %v258
    %v355 = vunpack.c.l.b16 %v259
    %v356 = vunpack.c.l.b16 %v260
    %v357 = vunpack.c.l.b16 %v261
    %v358 = vunpack.c.l.b16 %v262
    %v359 = vunpack.c.l.b16 %v263
    %v360 = vunpack.c.l.b16 %v264
    %v361 = vunpack.c.l.b16 %v265
    %v362 = vunpack.c.l.b16 %v266
    %v363 = vunpack.c.l.b16 %v267
    %v364 = vunpack.c.l.b16 %v268
    %v365 = vunpack.c.l.b16 %v269
    %v366 = vunpack.c.l.b16 %v270
    %v367 = vunpack.c.l.b16 %v271
    %v368 = vunpack.c.l.b16 %v272
    %v369 = vunpack.c.l.b16 %v273
    %v370 = vunpack.c.l.b16 %v274
    %v371 = vunpack.c.l.b16 %v275
    %v372 = vunpack.c.l.b16 %v276
    %v373 = vunpack.c.l.b16 %v277
    %v374 = vunpack.c.l.b16 %v278
    %v375 = vunpack.c.l.b16 %v279
    %v376 = vunpack.c.l.b16 %v280
    %v377 = vunpack.c.l.b16 %v281
    %v378 = vunpack.c.l.b16 %v282
    %v379 = vunpack.c.l.b16 %v283
    %v380 = vunpack.c.l.b16 %v284
    %v381 = vunpack.c.l.b16 %v285
    %v382 = vunpack.c.l.b16 %v286
    %v383 = vunpack.c.l.b16 %v287
    %v384 = vunpack.c.l.b16 %v288
    %v385 = vunpack.c.l.b16 %v289
    %v386 = vunpack.c.l.b16 %v290
    %v387 = vunpack.c.l.b16 %v291
    %v388 = vunpack.c.l.b16 %v292
    %v389 = vunpack.c.l.b16 %v293
    %v390 = vunpack.c.l.b16 %v294
    %v391 = vunpack.c.l.b16 %v295
    %v392 = vunpack.c.l.b16 %v296
    %v393 = vunpack.c.l.b16 %v297
    %v394 = vpack.c.b16 %v347, %v346
    %v395 = vpack.c.b16 %v349, %v348
    %v396 = vpack.c.b16 %v351, %v350
    %v397 = vpack.c.b16 %v353, %v352
    %v398 = vpack.c.b16 %v355, %v354
    %v399 = vpack.c.b16 %v357, %v356
    %v400 = vpack.c.b16 %v359, %v358
    %v401 = vpack.c.b16 %v361, %v360
    %v402 = vpack.c.b16 %v363, %v362
    %v403 = vpack.c.b16 %v365, %v364
    %v404 = vpack.c.b16 %v367, %v366
    %v405 = vpack.c.b16 %v369, %v368
    %v406 = vpack.c.b16 %v371, %v370
    %v407 = vpack.c.b16 %v373, %v372
    %v408 = vpack.c.b16 %v375, %v374
    %v409 = vpack.c.b16 %v377, %v376
    %v410 = vpack.c.b16 %v379, %v378
    %v411 = vpack.c.b16 %v381, %v380
    %v412 = vpack.c.b16 %v383, %v382
    %v413 = vpack.c.b16 %v385, %v384
    %v414 = vpack.c.b16 %v387, %v386
    %v415 = vpack.c.b16 %v389, %v388
    %v416 = vpack.c.b16 %v391, %v390
    %v417 = vpack.c.b16 %v393, %v392
    %442 = vmatpush.bf16.msra.mxu0 %v401
    %443 = vmatpush.bf16.msra.mxu0 %v400
    %444 = vmatpush.bf16.msra.mxu0 %v399
    %445 = vmatpush.bf16.msra.mxu0 %v398
    %446 = vmatpush.bf16.msra.mxu0 %v397
    %447 = vmatpush.bf16.msra.mxu0 %v396
    %448 = vmatpush.bf16.msra.mxu0 %v395
    %449 = vmatpush.bf16.msra.mxu0 %v394
    %450 = vmatmul.bf16.gmra.mxu0 %v194
    %v451 = vpop.f32.mrf.mxu0
    %v452 = vadd.f32 0.0, %v451
    %v453 = vpop.f32.mrf.mxu0
    %v454 = vadd.f32 0.0, %v453
    %455 = vmatmul.bf16.gmra.mxu0 %v195
    %v456 = vpop.f32.mrf.mxu0
    %v457 = vadd.f32 0.0, %v456
    %v458 = vpop.f32.mrf.mxu0
    %v459 = vadd.f32 0.0, %v458
    %460 = vmatmul.bf16.gmra.mxu0 %v196
    %v461 = vpop.f32.mrf.mxu0
    %v462 = vadd.f32 0.0, %v461
    %v463 = vpop.f32.mrf.mxu0
    %v464 = vadd.f32 0.0, %v463
    %465 = vmatmul.bf16.gmra.mxu0 %v197
    %v466 = vpop.f32.mrf.mxu0
    %v467 = vadd.f32 0.0, %v466
    %v468 = vpop.f32.mrf.mxu0
    %v469 = vadd.f32 0.0, %v468
    %470 = vdwg.mxu0
    %471 = vmatpush.bf16.msra.mxu0 %v409
    %472 = vmatpush.bf16.msra.mxu0 %v408
    %473 = vmatpush.bf16.msra.mxu0 %v407
    %474 = vmatpush.bf16.msra.mxu0 %v406
    %475 = vmatpush.bf16.msra.mxu0 %v405
    %476 = vmatpush.bf16.msra.mxu0 %v404
    %477 = vmatpush.bf16.msra.mxu0 %v403
    %478 = vmatpush.bf16.msra.mxu0 %v402
    %479 = vmatmul.bf16.gmra.mxu0 %v218
    %v480 = vpop.f32.mrf.mxu0
    %v481 = vadd.f32 %v452, %v480
    %v482 = vpop.f32.mrf.mxu0
    %v483 = vadd.f32 %v454, %v482
    %484 = vmatmul.bf16.gmra.mxu0 %v219
    %v485 = vpop.f32.mrf.mxu0
    %v486 = vadd.f32 %v457, %v485
    %v487 = vpop.f32.mrf.mxu0
    %v488 = vadd.f32 %v459, %v487
    %489 = vmatmul.bf16.gmra.mxu0 %v220
    %v490 = vpop.f32.mrf.mxu0
    %v491 = vadd.f32 %v462, %v490
    %v492 = vpop.f32.mrf.mxu0
    %v493 = vadd.f32 %v464, %v492
    %494 = vmatmul.bf16.gmra.mxu0 %v221
    %v495 = vpop.f32.mrf.mxu0
    %v496 = vadd.f32 %v467, %v495
    %v497 = vpop.f32.mrf.mxu0
    %v498 = vadd.f32 %v469, %v497
    %499 = vdwg.mxu0
    %500 = vmatpush.bf16.msra.mxu0 %v417
    %501 = vmatpush.bf16.msra.mxu0 %v416
    %502 = vmatpush.bf16.msra.mxu0 %v415
    %503 = vmatpush.bf16.msra.mxu0 %v414
    %504 = vmatpush.bf16.msra.mxu0 %v413
    %505 = vmatpush.bf16.msra.mxu0 %v412
    %506 = vmatpush.bf16.msra.mxu0 %v411
    %507 = vmatpush.bf16.msra.mxu0 %v410
    %508 = vmatmul.bf16.gmra.mxu0 %v242
    %v509 = vpop.f32.mrf.mxu0
    %v510 = vadd.f32 %v481, %v509
    %v511 = vpop.f32.mrf.mxu0
    %v512 = vadd.f32 %v483, %v511
    %513 = vmatmul.bf16.gmra.mxu0 %v243
    %v514 = vpop.f32.mrf.mxu0
    %v515 = vadd.f32 %v486, %v514
    %v516 = vpop.f32.mrf.mxu0
    %v517 = vadd.f32 %v488, %v516
    %518 = vmatmul.bf16.gmra.mxu0 %v244
    %v519 = vpop.f32.mrf.mxu0
    %v520 = vadd.f32 %v491, %v519
    %v521 = vpop.f32.mrf.mxu0
    %v522 = vadd.f32 %v493, %v521
    %523 = vmatmul.bf16.gmra.mxu0 %v245
    %v524 = vpop.f32.mrf.mxu0
    %v525 = vadd.f32 %v496, %v524
    %v526 = vpop.f32.mrf.mxu0
    %v527 = vadd.f32 %v498, %v526
    %528 = vdwg.mxu0
    %v529 = vadd.f32 %v128, %v510
    %v530 = vadd.f32 %v128, %v512
    %v531 = vadd.f32 %v128, %v515
    %v532 = vadd.f32 %v128, %v517
    %v533 = vadd.f32 %v128, %v520
    %v534 = vadd.f32 %v128, %v522
    %v535 = vadd.f32 %v128, %v525
    %v536 = vadd.f32 %v128, %v527
    %v537 = vld [vmem:[%s117] sm:$0xff]
    %v538 = vld [vmem:[%s117 + $0x10] sm:$0xff]
    %v539 = vld [vmem:[%s117 + $0x20] sm:$0xff]
    %v540 = vld [vmem:[%s117 + $0x30] sm:$0xff]
    %v541 = vld [vmem:[%s117 + $0x60] sm:$0xff]
    %v542 = vld [vmem:[%s117 + $0x70] sm:$0xff]
    %v543 = vld [vmem:[%s117 + $0x80] sm:$0xff]
    %v544 = vld [vmem:[%s117 + $0x90] sm:$0xff]
    %v545 = vpack.c.bf16 %v537, %v537
    %v546 = vpack.c.bf16 %v538, %v538
    %v547 = vpack.c.bf16 %v539, %v539
    %v548 = vpack.c.bf16 %v540, %v540
    %v549 = vpack.c.bf16 %v541, %v541
    %v550 = vpack.c.bf16 %v542, %v542
    %v551 = vpack.c.bf16 %v543, %v543
    %v552 = vpack.c.bf16 %v544, %v544
    %v553 = vld [vmem:[%s117 + $0x1] sm:$0xff]
    %v554 = vld [vmem:[%s117 + $0x11] sm:$0xff]
    %v555 = vld [vmem:[%s117 + $0x21] sm:$0xff]
    %v556 = vld [vmem:[%s117 + $0x31] sm:$0xff]
    %v557 = vld [vmem:[%s117 + $0x61] sm:$0xff]
    %v558 = vld [vmem:[%s117 + $0x71] sm:$0xff]
    %v559 = vld [vmem:[%s117 + $0x81] sm:$0xff]
    %v560 = vld [vmem:[%s117 + $0x91] sm:$0xff]
    %v561 = vpack.c.bf16 %v553, %v553
    %v562 = vpack.c.bf16 %v554, %v554
    %v563 = vpack.c.bf16 %v555, %v555
    %v564 = vpack.c.bf16 %v556, %v556
    %v565 = vpack.c.bf16 %v557, %v557
    %v566 = vpack.c.bf16 %v558, %v558
    %v567 = vpack.c.bf16 %v559, %v559
    %v568 = vpack.c.bf16 %v560, %v560
    %v569 = vld [vmem:[%s117 + $0x2] sm:$0xff]
    %v570 = vld [vmem:[%s117 + $0x12] sm:$0xff]
    %v571 = vld [vmem:[%s117 + $0x22] sm:$0xff]
    %v572 = vld [vmem:[%s117 + $0x32] sm:$0xff]
    %v573 = vld [vmem:[%s117 + $0x62] sm:$0xff]
    %v574 = vld [vmem:[%s117 + $0x72] sm:$0xff]
    %v575 = vld [vmem:[%s117 + $0x82] sm:$0xff]
    %v576 = vld [vmem:[%s117 + $0x92] sm:$0xff]
    %v577 = vpack.c.bf16 %v569, %v569
    %v578 = vpack.c.bf16 %v570, %v570
    %v579 = vpack.c.bf16 %v571, %v571
    %v580 = vpack.c.bf16 %v572, %v572
    %v581 = vpack.c.bf16 %v573, %v573
    %v582 = vpack.c.bf16 %v574, %v574
    %v583 = vpack.c.bf16 %v575, %v575
    %v584 = vpack.c.bf16 %v576, %v576
    %v593 = vunpack.c.l.b16 %v545
    %v594 = vunpack.c.l.b16 %v546
    %v595 = vunpack.c.l.b16 %v547
    %v596 = vunpack.c.l.b16 %v548
    %v597 = vunpack.c.l.b16 %v549
    %v598 = vunpack.c.l.b16 %v550
    %v599 = vunpack.c.l.b16 %v551
    %v600 = vunpack.c.l.b16 %v552
    %v601 = vpack.c.b16 %v594, %v593
    %v602 = vpack.c.b16 %v596, %v595
    %v603 = vpack.c.b16 %v598, %v597
    %v604 = vpack.c.b16 %v600, %v599
    %v617 = vunpack.c.l.b16 %v561
    %v618 = vunpack.c.l.b16 %v562
    %v619 = vunpack.c.l.b16 %v563
    %v620 = vunpack.c.l.b16 %v564
    %v621 = vunpack.c.l.b16 %v565
    %v622 = vunpack.c.l.b16 %v566
    %v623 = vunpack.c.l.b16 %v567
    %v624 = vunpack.c.l.b16 %v568
    %v625 = vpack.c.b16 %v618, %v617
    %v626 = vpack.c.b16 %v620, %v619
    %v627 = vpack.c.b16 %v622, %v621
    %v628 = vpack.c.b16 %v624, %v623
    %v641 = vunpack.c.l.b16 %v577
    %v642 = vunpack.c.l.b16 %v578
    %v643 = vunpack.c.l.b16 %v579
    %v644 = vunpack.c.l.b16 %v580
    %v645 = vunpack.c.l.b16 %v581
    %v646 = vunpack.c.l.b16 %v582
    %v647 = vunpack.c.l.b16 %v583
    %v648 = vunpack.c.l.b16 %v584
    %v649 = vpack.c.b16 %v642, %v641
    %v650 = vpack.c.b16 %v644, %v643
    %v651 = vpack.c.b16 %v646, %v645
    %v652 = vpack.c.b16 %v648, %v647
    %s657 = scalar_lea.vmem [#allocation6], 192
    %v658 = vld [vmem:[%s657] sm:$0xf]
    %v659 = vld [vmem:[%s657 + $0x4] sm:$0xf]
    %v660 = vld [vmem:[%s657 + $0x8] sm:$0xf]
    %v661 = vld [vmem:[%s657 + $0xc] sm:$0xf]
    %v662 = vld [vmem:[%s657 + $0x10] sm:$0xf]
    %v663 = vld [vmem:[%s657 + $0x14] sm:$0xf]
    %v664 = vld [vmem:[%s657 + $0x18] sm:$0xf]
    %v665 = vld [vmem:[%s657 + $0x1c] sm:$0xf]
    %v666 = vld [vmem:[%s657 + $0x20] sm:$0xf]
    %v667 = vld [vmem:[%s657 + $0x24] sm:$0xf]
    %v668 = vld [vmem:[%s657 + $0x28] sm:$0xf]
    %v669 = vld [vmem:[%s657 + $0x2c] sm:$0xf]
    %v670 = vld [vmem:[%s657 + $0x30] sm:$0xf]
    %v671 = vld [vmem:[%s657 + $0x34] sm:$0xf]
    %v672 = vld [vmem:[%s657 + $0x38] sm:$0xf]
    %v673 = vld [vmem:[%s657 + $0x3c] sm:$0xf]
    %v674 = vld [vmem:[%s657 + $0x40] sm:$0xf]
    %v675 = vld [vmem:[%s657 + $0x44] sm:$0xf]
    %v676 = vld [vmem:[%s657 + $0x48] sm:$0xf]
    %v677 = vld [vmem:[%s657 + $0x4c] sm:$0xf]
    %v678 = vld [vmem:[%s657 + $0x50] sm:$0xf]
    %v679 = vld [vmem:[%s657 + $0x54] sm:$0xf]
    %v680 = vld [vmem:[%s657 + $0x58] sm:$0xf]
    %v681 = vld [vmem:[%s657 + $0x5c] sm:$0xf]
    %v682 = vld [vmem:[%s657 + $0x60] sm:$0xf]
    %v683 = vld [vmem:[%s657 + $0x64] sm:$0xf]
    %v684 = vld [vmem:[%s657 + $0x68] sm:$0xf]
    %v685 = vld [vmem:[%s657 + $0x6c] sm:$0xf]
    %v686 = vld [vmem:[%s657 + $0x70] sm:$0xf]
    %v687 = vld [vmem:[%s657 + $0x74] sm:$0xf]
    %v688 = vld [vmem:[%s657 + $0x78] sm:$0xf]
    %v689 = vld [vmem:[%s657 + $0x7c] sm:$0xf]
    %v690 = vld [vmem:[%s657 + $0x80] sm:$0xf]
    %v691 = vld [vmem:[%s657 + $0x84] sm:$0xf]
    %v692 = vld [vmem:[%s657 + $0x88] sm:$0xf]
    %v693 = vld [vmem:[%s657 + $0x8c] sm:$0xf]
    %v694 = vld [vmem:[%s657 + $0x90] sm:$0xf]
    %v695 = vld [vmem:[%s657 + $0x94] sm:$0xf]
    %v696 = vld [vmem:[%s657 + $0x98] sm:$0xf]
    %v697 = vld [vmem:[%s657 + $0x9c] sm:$0xf]
    %v698 = vld [vmem:[%s657 + $0xa0] sm:$0xf]
    %v699 = vld [vmem:[%s657 + $0xa4] sm:$0xf]
    %v700 = vld [vmem:[%s657 + $0xa8] sm:$0xf]
    %v701 = vld [vmem:[%s657 + $0xac] sm:$0xf]
    %v702 = vld [vmem:[%s657 + $0xb0] sm:$0xf]
    %v703 = vld [vmem:[%s657 + $0xb4] sm:$0xf]
    %v704 = vld [vmem:[%s657 + $0xb8] sm:$0xf]
    %v705 = vld [vmem:[%s657 + $0xbc] sm:$0xf]
    %v754 = vunpack.c.l.b16 %v658
    %v755 = vunpack.c.l.b16 %v659
    %v756 = vunpack.c.l.b16 %v660
    %v757 = vunpack.c.l.b16 %v661
    %v758 = vunpack.c.l.b16 %v662
    %v759 = vunpack.c.l.b16 %v663
    %v760 = vunpack.c.l.b16 %v664
    %v761 = vunpack.c.l.b16 %v665
    %v762 = vunpack.c.l.b16 %v666
    %v763 = vunpack.c.l.b16 %v667
    %v764 = vunpack.c.l.b16 %v668
    %v765 = vunpack.c.l.b16 %v669
    %v766 = vunpack.c.l.b16 %v670
    %v767 = vunpack.c.l.b16 %v671
    %v768 = vunpack.c.l.b16 %v672
    %v769 = vunpack.c.l.b16 %v673
    %v770 = vunpack.c.l.b16 %v674
    %v771 = vunpack.c.l.b16 %v675
    %v772 = vunpack.c.l.b16 %v676
    %v773 = vunpack.c.l.b16 %v677
    %v774 = vunpack.c.l.b16 %v678
    %v775 = vunpack.c.l.b16 %v679
    %v776 = vunpack.c.l.b16 %v680
    %v777 = vunpack.c.l.b16 %v681
    %v778 = vunpack.c.l.b16 %v682
    %v779 = vunpack.c.l.b16 %v683
    %v780 = vunpack.c.l.b16 %v684
    %v781 = vunpack.c.l.b16 %v685
    %v782 = vunpack.c.l.b16 %v686
    %v783 = vunpack.c.l.b16 %v687
    %v784 = vunpack.c.l.b16 %v688
    %v785 = vunpack.c.l.b16 %v689
    %v786 = vunpack.c.l.b16 %v690
    %v787 = vunpack.c.l.b16 %v691
    %v788 = vunpack.c.l.b16 %v692
    %v789 = vunpack.c.l.b16 %v693
    %v790 = vunpack.c.l.b16 %v694
    %v791 = vunpack.c.l.b16 %v695
    %v792 = vunpack.c.l.b16 %v696
    %v793 = vunpack.c.l.b16 %v697
    %v794 = vunpack.c.l.b16 %v698
    %v795 = vunpack.c.l.b16 %v699
    %v796 = vunpack.c.l.b16 %v700
    %v797 = vunpack.c.l.b16 %v701
    %v798 = vunpack.c.l.b16 %v702
    %v799 = vunpack.c.l.b16 %v703
    %v800 = vunpack.c.l.b16 %v704
    %v801 = vunpack.c.l.b16 %v705
    %v802 = vpack.c.b16 %v755, %v754
    %v803 = vpack.c.b16 %v757, %v756
    %v804 = vpack.c.b16 %v759, %v758
    %v805 = vpack.c.b16 %v761, %v760
    %v806 = vpack.c.b16 %v763, %v762
    %v807 = vpack.c.b16 %v765, %v764
    %v808 = vpack.c.b16 %v767, %v766
    %v809 = vpack.c.b16 %v769, %v768
    %v810 = vpack.c.b16 %v771, %v770
    %v811 = vpack.c.b16 %v773, %v772
    %v812 = vpack.c.b16 %v775, %v774
    %v813 = vpack.c.b16 %v777, %v776
    %v814 = vpack.c.b16 %v779, %v778
    %v815 = vpack.c.b16 %v781, %v780
    %v816 = vpack.c.b16 %v783, %v782
    %v817 = vpack.c.b16 %v785, %v784
    %v818 = vpack.c.b16 %v787, %v786
    %v819 = vpack.c.b16 %v789, %v788
    %v820 = vpack.c.b16 %v791, %v790
    %v821 = vpack.c.b16 %v793, %v792
    %v822 = vpack.c.b16 %v795, %v794
    %v823 = vpack.c.b16 %v797, %v796
    %v824 = vpack.c.b16 %v799, %v798
    %v825 = vpack.c.b16 %v801, %v800
    %850 = vmatpush.bf16.msra.mxu0 %v809
    %851 = vmatpush.bf16.msra.mxu0 %v808
    %852 = vmatpush.bf16.msra.mxu0 %v807
    %853 = vmatpush.bf16.msra.mxu0 %v806
    %854 = vmatpush.bf16.msra.mxu0 %v805
    %855 = vmatpush.bf16.msra.mxu0 %v804
    %856 = vmatpush.bf16.msra.mxu0 %v803
    %857 = vmatpush.bf16.msra.mxu0 %v802
    %858 = vmatmul.bf16.gmra.mxu0 %v601
    %v859 = vpop.f32.mrf.mxu0
    %v860 = vadd.f32 0.0, %v859
    %v861 = vpop.f32.mrf.mxu0
    %v862 = vadd.f32 0.0, %v861
    %863 = vmatmul.bf16.gmra.mxu0 %v602
    %v864 = vpop.f32.mrf.mxu0
    %v865 = vadd.f32 0.0, %v864
    %v866 = vpop.f32.mrf.mxu0
    %v867 = vadd.f32 0.0, %v866
    %868 = vmatmul.bf16.gmra.mxu0 %v603
    %v869 = vpop.f32.mrf.mxu0
    %v870 = vadd.f32 0.0, %v869
    %v871 = vpop.f32.mrf.mxu0
    %v872 = vadd.f32 0.0, %v871
    %873 = vmatmul.bf16.gmra.mxu0 %v604
    %v874 = vpop.f32.mrf.mxu0
    %v875 = vadd.f32 0.0, %v874
    %v876 = vpop.f32.mrf.mxu0
    %v877 = vadd.f32 0.0, %v876
    %878 = vdwg.mxu0
    %879 = vmatpush.bf16.msra.mxu0 %v817
    %880 = vmatpush.bf16.msra.mxu0 %v816
    %881 = vmatpush.bf16.msra.mxu0 %v815
    %882 = vmatpush.bf16.msra.mxu0 %v814
    %883 = vmatpush.bf16.msra.mxu0 %v813
    %884 = vmatpush.bf16.msra.mxu0 %v812
    %885 = vmatpush.bf16.msra.mxu0 %v811
    %886 = vmatpush.bf16.msra.mxu0 %v810
    %887 = vmatmul.bf16.gmra.mxu0 %v625
    %v888 = vpop.f32.mrf.mxu0
    %v889 = vadd.f32 %v860, %v888
    %v890 = vpop.f32.mrf.mxu0
    %v891 = vadd.f32 %v862, %v890
    %892 = vmatmul.bf16.gmra.mxu0 %v626
    %v893 = vpop.f32.mrf.mxu0
    %v894 = vadd.f32 %v865, %v893
    %v895 = vpop.f32.mrf.mxu0
    %v896 = vadd.f32 %v867, %v895
    %897 = vmatmul.bf16.gmra.mxu0 %v627
    %v898 = vpop.f32.mrf.mxu0
    %v899 = vadd.f32 %v870, %v898
    %v900 = vpop.f32.mrf.mxu0
    %v901 = vadd.f32 %v872, %v900
    %902 = vmatmul.bf16.gmra.mxu0 %v628
    %v903 = vpop.f32.mrf.mxu0
    %v904 = vadd.f32 %v875, %v903
    %v905 = vpop.f32.mrf.mxu0
    %v906 = vadd.f32 %v877, %v905
    %907 = vdwg.mxu0
    %908 = vmatpush.bf16.msra.mxu0 %v825
    %909 = vmatpush.bf16.msra.mxu0 %v824
    %910 = vmatpush.bf16.msra.mxu0 %v823
    %911 = vmatpush.bf16.msra.mxu0 %v822
    %912 = vmatpush.bf16.msra.mxu0 %v821
    %913 = vmatpush.bf16.msra.mxu0 %v820
    %914 = vmatpush.bf16.msra.mxu0 %v819
    %915 = vmatpush.bf16.msra.mxu0 %v818
    %916 = vmatmul.bf16.gmra.mxu0 %v649
    %v917 = vpop.f32.mrf.mxu0
    %v918 = vadd.f32 %v889, %v917
    %v919 = vpop.f32.mrf.mxu0
    %v920 = vadd.f32 %v891, %v919
    %921 = vmatmul.bf16.gmra.mxu0 %v650
    %v922 = vpop.f32.mrf.mxu0
    %v923 = vadd.f32 %v894, %v922
    %v924 = vpop.f32.mrf.mxu0
    %v925 = vadd.f32 %v896, %v924
    %926 = vmatmul.bf16.gmra.mxu0 %v651
    %v927 = vpop.f32.mrf.mxu0
    %v928 = vadd.f32 %v899, %v927
    %v929 = vpop.f32.mrf.mxu0
    %v930 = vadd.f32 %v901, %v929
    %931 = vmatmul.bf16.gmra.mxu0 %v652
    %v932 = vpop.f32.mrf.mxu0
    %v933 = vadd.f32 %v904, %v932
    %v934 = vpop.f32.mrf.mxu0
    %v935 = vadd.f32 %v906, %v934
    %936 = vdwg.mxu0
    %v937 = vadd.f32 %v529, %v918
    %v938 = vadd.f32 %v530, %v920
    %v939 = vadd.f32 %v531, %v923
    %v940 = vadd.f32 %v532, %v925
    %v941 = vadd.f32 %v533, %v928
    %v942 = vadd.f32 %v534, %v930
    %v943 = vadd.f32 %v535, %v933
    %v944 = vadd.f32 %v536, %v935
    %s945 = scalar_lea.vmem [#allocation2], 32
    %v946 = vld [vmem:[%s945] sm:$0xff]
    %v947 = vld [vmem:[%s945 + $0x10] sm:$0xff]
    %v948 = vld [vmem:[%s945 + $0x20] sm:$0xff]
    %v949 = vld [vmem:[%s945 + $0x30] sm:$0xff]
    %v950 = vld [vmem:[%s945 + $0x60] sm:$0xff]
    %v951 = vld [vmem:[%s945 + $0x70] sm:$0xff]
    %v952 = vld [vmem:[%s945 + $0x80] sm:$0xff]
    %v953 = vld [vmem:[%s945 + $0x90] sm:$0xff]
    %v954 = vpack.c.bf16 %v946, %v946
    %v955 = vpack.c.bf16 %v947, %v947
    %v956 = vpack.c.bf16 %v948, %v948
    %v957 = vpack.c.bf16 %v949, %v949
    %v958 = vpack.c.bf16 %v950, %v950
    %v959 = vpack.c.bf16 %v951, %v951
    %v960 = vpack.c.bf16 %v952, %v952
    %v961 = vpack.c.bf16 %v953, %v953
    %v962 = vld [vmem:[%s945 + $0x1] sm:$0xff]
    %v963 = vld [vmem:[%s945 + $0x11] sm:$0xff]
    %v964 = vld [vmem:[%s945 + $0x21] sm:$0xff]
    %v965 = vld [vmem:[%s945 + $0x31] sm:$0xff]
    %v966 = vld [vmem:[%s945 + $0x61] sm:$0xff]
    %v967 = vld [vmem:[%s945 + $0x71] sm:$0xff]
    %v968 = vld [vmem:[%s945 + $0x81] sm:$0xff]
    %v969 = vld [vmem:[%s945 + $0x91] sm:$0xff]
    %v970 = vpack.c.bf16 %v962, %v962
    %v971 = vpack.c.bf16 %v963, %v963
    %v972 = vpack.c.bf16 %v964, %v964
    %v973 = vpack.c.bf16 %v965, %v965
    %v974 = vpack.c.bf16 %v966, %v966
    %v975 = vpack.c.bf16 %v967, %v967
    %v976 = vpack.c.bf16 %v968, %v968
    %v977 = vpack.c.bf16 %v969, %v969
    %v978 = vld [vmem:[%s945 + $0x2] sm:$0xff]
    %v979 = vld [vmem:[%s945 + $0x12] sm:$0xff]
    %v980 = vld [vmem:[%s945 + $0x22] sm:$0xff]
    %v981 = vld [vmem:[%s945 + $0x32] sm:$0xff]
    %v982 = vld [vmem:[%s945 + $0x62] sm:$0xff]
    %v983 = vld [vmem:[%s945 + $0x72] sm:$0xff]
    %v984 = vld [vmem:[%s945 + $0x82] sm:$0xff]
    %v985 = vld [vmem:[%s945 + $0x92] sm:$0xff]
    %v986 = vpack.c.bf16 %v978, %v978
    %v987 = vpack.c.bf16 %v979, %v979
    %v988 = vpack.c.bf16 %v980, %v980
    %v989 = vpack.c.bf16 %v981, %v981
    %v990 = vpack.c.bf16 %v982, %v982
    %v991 = vpack.c.bf16 %v983, %v983
    %v992 = vpack.c.bf16 %v984, %v984
    %v993 = vpack.c.bf16 %v985, %v985
    %v1002 = vunpack.c.l.b16 %v954
    %v1003 = vunpack.c.l.b16 %v955
    %v1004 = vunpack.c.l.b16 %v956
    %v1005 = vunpack.c.l.b16 %v957
    %v1006 = vunpack.c.l.b16 %v958
    %v1007 = vunpack.c.l.b16 %v959
    %v1008 = vunpack.c.l.b16 %v960
    %v1009 = vunpack.c.l.b16 %v961
    %v1010 = vpack.c.b16 %v1003, %v1002
    %v1011 = vpack.c.b16 %v1005, %v1004
    %v1012 = vpack.c.b16 %v1007, %v1006
    %v1013 = vpack.c.b16 %v1009, %v1008
    %v1026 = vunpack.c.l.b16 %v970
    %v1027 = vunpack.c.l.b16 %v971
    %v1028 = vunpack.c.l.b16 %v972
    %v1029 = vunpack.c.l.b16 %v973
    %v1030 = vunpack.c.l.b16 %v974
    %v1031 = vunpack.c.l.b16 %v975
    %v1032 = vunpack.c.l.b16 %v976
    %v1033 = vunpack.c.l.b16 %v977
    %v1034 = vpack.c.b16 %v1027, %v1026
    %v1035 = vpack.c.b16 %v1029, %v1028
    %v1036 = vpack.c.b16 %v1031, %v1030
    %v1037 = vpack.c.b16 %v1033, %v1032
    %v1050 = vunpack.c.l.b16 %v986
    %v1051 = vunpack.c.l.b16 %v987
    %v1052 = vunpack.c.l.b16 %v988
    %v1053 = vunpack.c.l.b16 %v989
    %v1054 = vunpack.c.l.b16 %v990
    %v1055 = vunpack.c.l.b16 %v991
    %v1056 = vunpack.c.l.b16 %v992
    %v1057 = vunpack.c.l.b16 %v993
    %v1058 = vpack.c.b16 %v1051, %v1050
    %v1059 = vpack.c.b16 %v1053, %v1052
    %v1060 = vpack.c.b16 %v1055, %v1054
    %v1061 = vpack.c.b16 %v1057, %v1056
    %s1066 = scalar_lea.vmem [#allocation6], 384
    %v1067 = vld [vmem:[%s1066] sm:$0xf]
    %v1068 = vld [vmem:[%s1066 + $0x4] sm:$0xf]
    %v1069 = vld [vmem:[%s1066 + $0x8] sm:$0xf]
    %v1070 = vld [vmem:[%s1066 + $0xc] sm:$0xf]
    %v1071 = vld [vmem:[%s1066 + $0x10] sm:$0xf]
    %v1072 = vld [vmem:[%s1066 + $0x14] sm:$0xf]
    %v1073 = vld [vmem:[%s1066 + $0x18] sm:$0xf]
    %v1074 = vld [vmem:[%s1066 + $0x1c] sm:$0xf]
    %v1075 = vld [vmem:[%s1066 + $0x20] sm:$0xf]
    %v1076 = vld [vmem:[%s1066 + $0x24] sm:$0xf]
    %v1077 = vld [vmem:[%s1066 + $0x28] sm:$0xf]
    %v1078 = vld [vmem:[%s1066 + $0x2c] sm:$0xf]
    %v1079 = vld [vmem:[%s1066 + $0x30] sm:$0xf]
    %v1080 = vld [vmem:[%s1066 + $0x34] sm:$0xf]
    %v1081 = vld [vmem:[%s1066 + $0x38] sm:$0xf]
    %v1082 = vld [vmem:[%s1066 + $0x3c] sm:$0xf]
    %v1083 = vld [vmem:[%s1066 + $0x40] sm:$0xf]
    %v1084 = vld [vmem:[%s1066 + $0x44] sm:$0xf]
    %v1085 = vld [vmem:[%s1066 + $0x48] sm:$0xf]
    %v1086 = vld [vmem:[%s1066 + $0x4c] sm:$0xf]
    %v1087 = vld [vmem:[%s1066 + $0x50] sm:$0xf]
    %v1088 = vld [vmem:[%s1066 + $0x54] sm:$0xf]
    %v1089 = vld [vmem:[%s1066 + $0x58] sm:$0xf]
    %v1090 = vld [vmem:[%s1066 + $0x5c] sm:$0xf]
    %v1091 = vld [vmem:[%s1066 + $0x60] sm:$0xf]
    %v1092 = vld [vmem:[%s1066 + $0x64] sm:$0xf]
    %v1093 = vld [vmem:[%s1066 + $0x68] sm:$0xf]
    %v1094 = vld [vmem:[%s1066 + $0x6c] sm:$0xf]
    %v1095 = vld [vmem:[%s1066 + $0x70] sm:$0xf]
    %v1096 = vld [vmem:[%s1066 + $0x74] sm:$0xf]
    %v1097 = vld [vmem:[%s1066 + $0x78] sm:$0xf]
    %v1098 = vld [vmem:[%s1066 + $0x7c] sm:$0xf]
    %v1099 = vld [vmem:[%s1066 + $0x80] sm:$0xf]
    %v1100 = vld [vmem:[%s1066 + $0x84] sm:$0xf]
    %v1101 = vld [vmem:[%s1066 + $0x88] sm:$0xf]
    %v1102 = vld [vmem:[%s1066 + $0x8c] sm:$0xf]
    %v1103 = vld [vmem:[%s1066 + $0x90] sm:$0xf]
    %v1104 = vld [vmem:[%s1066 + $0x94] sm:$0xf]
    %v1105 = vld [vmem:[%s1066 + $0x98] sm:$0xf]
    %v1106 = vld [vmem:[%s1066 + $0x9c] sm:$0xf]
    %v1107 = vld [vmem:[%s1066 + $0xa0] sm:$0xf]
    %v1108 = vld [vmem:[%s1066 + $0xa4] sm:$0xf]
    %v1109 = vld [vmem:[%s1066 + $0xa8] sm:$0xf]
    %v1110 = vld [vmem:[%s1066 + $0xac] sm:$0xf]
    %v1111 = vld [vmem:[%s1066 + $0xb0] sm:$0xf]
    %v1112 = vld [vmem:[%s1066 + $0xb4] sm:$0xf]
    %v1113 = vld [vmem:[%s1066 + $0xb8] sm:$0xf]
    %v1114 = vld [vmem:[%s1066 + $0xbc] sm:$0xf]
    %v1163 = vunpack.c.l.b16 %v1067
    %v1164 = vunpack.c.l.b16 %v1068
    %v1165 = vunpack.c.l.b16 %v1069
    %v1166 = vunpack.c.l.b16 %v1070
    %v1167 = vunpack.c.l.b16 %v1071
    %v1168 = vunpack.c.l.b16 %v1072
    %v1169 = vunpack.c.l.b16 %v1073
    %v1170 = vunpack.c.l.b16 %v1074
    %v1171 = vunpack.c.l.b16 %v1075
    %v1172 = vunpack.c.l.b16 %v1076
    %v1173 = vunpack.c.l.b16 %v1077
    %v1174 = vunpack.c.l.b16 %v1078
    %v1175 = vunpack.c.l.b16 %v1079
    %v1176 = vunpack.c.l.b16 %v1080
    %v1177 = vunpack.c.l.b16 %v1081
    %v1178 = vunpack.c.l.b16 %v1082
    %v1179 = vunpack.c.l.b16 %v1083
    %v1180 = vunpack.c.l.b16 %v1084
    %v1181 = vunpack.c.l.b16 %v1085
    %v1182 = vunpack.c.l.b16 %v1086
    %v1183 = vunpack.c.l.b16 %v1087
    %v1184 = vunpack.c.l.b16 %v1088
    %v1185 = vunpack.c.l.b16 %v1089
    %v1186 = vunpack.c.l.b16 %v1090
    %v1187 = vunpack.c.l.b16 %v1091
    %v1188 = vunpack.c.l.b16 %v1092
    %v1189 = vunpack.c.l.b16 %v1093
    %v1190 = vunpack.c.l.b16 %v1094
    %v1191 = vunpack.c.l.b16 %v1095
    %v1192 = vunpack.c.l.b16 %v1096
    %v1193 = vunpack.c.l.b16 %v1097
    %v1194 = vunpack.c.l.b16 %v1098
    %v1195 = vunpack.c.l.b16 %v1099
    %v1196 = vunpack.c.l.b16 %v1100
    %v1197 = vunpack.c.l.b16 %v1101
    %v1198 = vunpack.c.l.b16 %v1102
    %v1199 = vunpack.c.l.b16 %v1103
    %v1200 = vunpack.c.l.b16 %v1104
    %v1201 = vunpack.c.l.b16 %v1105
    %v1202 = vunpack.c.l.b16 %v1106
    %v1203 = vunpack.c.l.b16 %v1107
    %v1204 = vunpack.c.l.b16 %v1108
    %v1205 = vunpack.c.l.b16 %v1109
    %v1206 = vunpack.c.l.b16 %v1110
    %v1207 = vunpack.c.l.b16 %v1111
    %v1208 = vunpack.c.l.b16 %v1112
    %v1209 = vunpack.c.l.b16 %v1113
    %v1210 = vunpack.c.l.b16 %v1114
    %v1211 = vpack.c.b16 %v1164, %v1163
    %v1212 = vpack.c.b16 %v1166, %v1165
    %v1213 = vpack.c.b16 %v1168, %v1167
    %v1214 = vpack.c.b16 %v1170, %v1169
    %v1215 = vpack.c.b16 %v1172, %v1171
    %v1216 = vpack.c.b16 %v1174, %v1173
    %v1217 = vpack.c.b16 %v1176, %v1175
    %v1218 = vpack.c.b16 %v1178, %v1177
    %v1219 = vpack.c.b16 %v1180, %v1179
    %v1220 = vpack.c.b16 %v1182, %v1181
    %v1221 = vpack.c.b16 %v1184, %v1183
    %v1222 = vpack.c.b16 %v1186, %v1185
    %v1223 = vpack.c.b16 %v1188, %v1187
    %v1224 = vpack.c.b16 %v1190, %v1189
    %v1225 = vpack.c.b16 %v1192, %v1191
    %v1226 = vpack.c.b16 %v1194, %v1193
    %v1227 = vpack.c.b16 %v1196, %v1195
    %v1228 = vpack.c.b16 %v1198, %v1197
    %v1229 = vpack.c.b16 %v1200, %v1199
    %v1230 = vpack.c.b16 %v1202, %v1201
    %v1231 = vpack.c.b16 %v1204, %v1203
    %v1232 = vpack.c.b16 %v1206, %v1205
    %v1233 = vpack.c.b16 %v1208, %v1207
    %v1234 = vpack.c.b16 %v1210, %v1209
    %1259 = vmatpush.bf16.msra.mxu0 %v1218
    %1260 = vmatpush.bf16.msra.mxu0 %v1217
    %1261 = vmatpush.bf16.msra.mxu0 %v1216
    %1262 = vmatpush.bf16.msra.mxu0 %v1215
    %1263 = vmatpush.bf16.msra.mxu0 %v1214
    %1264 = vmatpush.bf16.msra.mxu0 %v1213
    %1265 = vmatpush.bf16.msra.mxu0 %v1212
    %1266 = vmatpush.bf16.msra.mxu0 %v1211
    %1267 = vmatmul.bf16.gmra.mxu0 %v1010
    %v1268 = vpop.f32.mrf.mxu0
    %v1269 = vadd.f32 0.0, %v1268
    %v1270 = vpop.f32.mrf.mxu0
    %v1271 = vadd.f32 0.0, %v1270
    %1272 = vmatmul.bf16.gmra.mxu0 %v1011
    %v1273 = vpop.f32.mrf.mxu0
    %v1274 = vadd.f32 0.0, %v1273
    %v1275 = vpop.f32.mrf.mxu0
    %v1276 = vadd.f32 0.0, %v1275
    %1277 = vmatmul.bf16.gmra.mxu0 %v1012
    %v1278 = vpop.f32.mrf.mxu0
    %v1279 = vadd.f32 0.0, %v1278
    %v1280 = vpop.f32.mrf.mxu0
    %v1281 = vadd.f32 0.0, %v1280
    %1282 = vmatmul.bf16.gmra.mxu0 %v1013
    %v1283 = vpop.f32.mrf.mxu0
    %v1284 = vadd.f32 0.0, %v1283
    %v1285 = vpop.f32.mrf.mxu0
    %v1286 = vadd.f32 0.0, %v1285
    %1287 = vdwg.mxu0
    %1288 = vmatpush.bf16.msra.mxu0 %v1226
    %1289 = vmatpush.bf16.msra.mxu0 %v1225
    %1290 = vmatpush.bf16.msra.mxu0 %v1224
    %1291 = vmatpush.bf16.msra.mxu0 %v1223
    %1292 = vmatpush.bf16.msra.mxu0 %v1222
    %1293 = vmatpush.bf16.msra.mxu0 %v1221
    %1294 = vmatpush.bf16.msra.mxu0 %v1220
    %1295 = vmatpush.bf16.msra.mxu0 %v1219
    %1296 = vmatmul.bf16.gmra.mxu0 %v1034
    %v1297 = vpop.f32.mrf.mxu0
    %v1298 = vadd.f32 %v1269, %v1297
    %v1299 = vpop.f32.mrf.mxu0
    %v1300 = vadd.f32 %v1271, %v1299
    %1301 = vmatmul.bf16.gmra.mxu0 %v1035
    %v1302 = vpop.f32.mrf.mxu0
    %v1303 = vadd.f32 %v1274, %v1302
    %v1304 = vpop.f32.mrf.mxu0
    %v1305 = vadd.f32 %v1276, %v1304
    %1306 = vmatmul.bf16.gmra.mxu0 %v1036
    %v1307 = vpop.f32.mrf.mxu0
    %v1308 = vadd.f32 %v1279, %v1307
    %v1309 = vpop.f32.mrf.mxu0
    %v1310 = vadd.f32 %v1281, %v1309
    %1311 = vmatmul.bf16.gmra.mxu0 %v1037
    %v1312 = vpop.f32.mrf.mxu0
    %v1313 = vadd.f32 %v1284, %v1312
    %v1314 = vpop.f32.mrf.mxu0
    %v1315 = vadd.f32 %v1286, %v1314
    %1316 = vdwg.mxu0
    %1317 = vmatpush.bf16.msra.mxu0 %v1234
    %1318 = vmatpush.bf16.msra.mxu0 %v1233
    %1319 = vmatpush.bf16.msra.mxu0 %v1232
    %1320 = vmatpush.bf16.msra.mxu0 %v1231
    %1321 = vmatpush.bf16.msra.mxu0 %v1230
    %1322 = vmatpush.bf16.msra.mxu0 %v1229
    %1323 = vmatpush.bf16.msra.mxu0 %v1228
    %1324 = vmatpush.bf16.msra.mxu0 %v1227
    %1325 = vmatmul.bf16.gmra.mxu0 %v1058
    %v1326 = vpop.f32.mrf.mxu0
    %v1327 = vadd.f32 %v1298, %v1326
    %v1328 = vpop.f32.mrf.mxu0
    %v1329 = vadd.f32 %v1300, %v1328
    %1330 = vmatmul.bf16.gmra.mxu0 %v1059
    %v1331 = vpop.f32.mrf.mxu0
    %v1332 = vadd.f32 %v1303, %v1331
    %v1333 = vpop.f32.mrf.mxu0
    %v1334 = vadd.f32 %v1305, %v1333
    %1335 = vmatmul.bf16.gmra.mxu0 %v1060
    %v1336 = vpop.f32.mrf.mxu0
    %v1337 = vadd.f32 %v1308, %v1336
    %v1338 = vpop.f32.mrf.mxu0
    %v1339 = vadd.f32 %v1310, %v1338
    %1340 = vmatmul.bf16.gmra.mxu0 %v1061
    %v1341 = vpop.f32.mrf.mxu0
    %v1342 = vadd.f32 %v1313, %v1341
    %v1343 = vpop.f32.mrf.mxu0
    %v1344 = vadd.f32 %v1315, %v1343
    %1345 = vdwg.mxu0
    %v1346 = vadd.f32 %v937, %v1327
    %v1347 = vadd.f32 %v938, %v1329
    %v1348 = vadd.f32 %v939, %v1332
    %v1349 = vadd.f32 %v940, %v1334
    %v1350 = vadd.f32 %v941, %v1337
    %v1351 = vadd.f32 %v942, %v1339
    %v1352 = vadd.f32 %v943, %v1342
    %v1353 = vadd.f32 %v944, %v1344
    %v1354 = vmax.f32 %v1346, 0.0
    %v1355 = vmax.f32 %v1347, 0.0
    %v1356 = vmax.f32 %v1348, 0.0
    %v1357 = vmax.f32 %v1349, 0.0
    %v1358 = vmax.f32 %v1350, 0.0
    %v1359 = vmax.f32 %v1351, 0.0
    %v1360 = vmax.f32 %v1352, 0.0
    %v1361 = vmax.f32 %v1353, 0.0
    %1362 = vst [vmem:[%s117 + $0x1] sm:$0xff] %v1354
    %1363 = vst [vmem:[%s117 + $0x11] sm:$0xff] %v1355
    %1364 = vst [vmem:[%s117 + $0x21] sm:$0xff] %v1356
    %1365 = vst [vmem:[%s117 + $0x31] sm:$0xff] %v1357
    %1366 = vst [vmem:[%s117 + $0x61] sm:$0xff] %v1358
    %1367 = vst [vmem:[%s117 + $0x71] sm:$0xff] %v1359
    %1368 = vst [vmem:[%s117 + $0x81] sm:$0xff] %v1360
    %1369 = vst [vmem:[%s117 + $0x91] sm:$0xff] %v1361
    %v1370 = vld [vmem:[%s4] sm:$0x1]
    %v1372 = vperm.slane %v1370, 0
    %v1374 = vld [vmem:[#allocation2] sm:$0xff]
    %v1375 = vld [vmem:[#allocation2 + $0x10] sm:$0xff]
    %v1376 = vld [vmem:[#allocation2 + $0x20] sm:$0xff]
    %v1377 = vld [vmem:[#allocation2 + $0x30] sm:$0xff]
    %v1378 = vld [vmem:[#allocation2 + $0x60] sm:$0xff]
    %v1379 = vld [vmem:[#allocation2 + $0x70] sm:$0xff]
    %v1380 = vld [vmem:[#allocation2 + $0x80] sm:$0xff]
    %v1381 = vld [vmem:[#allocation2 + $0x90] sm:$0xff]
    %v1382 = vpack.c.bf16 %v1374, %v1374
    %v1383 = vpack.c.bf16 %v1375, %v1375
    %v1384 = vpack.c.bf16 %v1376, %v1376
    %v1385 = vpack.c.bf16 %v1377, %v1377
    %v1386 = vpack.c.bf16 %v1378, %v1378
    %v1387 = vpack.c.bf16 %v1379, %v1379
    %v1388 = vpack.c.bf16 %v1380, %v1380
    %v1389 = vpack.c.bf16 %v1381, %v1381
    %v1390 = vld [vmem:[#allocation2 + $0x1] sm:$0xff]
    %v1391 = vld [vmem:[#allocation2 + $0x11] sm:$0xff]
    %v1392 = vld [vmem:[#allocation2 + $0x21] sm:$0xff]
    %v1393 = vld [vmem:[#allocation2 + $0x31] sm:$0xff]
    %v1394 = vld [vmem:[#allocation2 + $0x61] sm:$0xff]
    %v1395 = vld [vmem:[#allocation2 + $0x71] sm:$0xff]
    %v1396 = vld [vmem:[#allocation2 + $0x81] sm:$0xff]
    %v1397 = vld [vmem:[#allocation2 + $0x91] sm:$0xff]
    %v1398 = vpack.c.bf16 %v1390, %v1390
    %v1399 = vpack.c.bf16 %v1391, %v1391
    %v1400 = vpack.c.bf16 %v1392, %v1392
    %v1401 = vpack.c.bf16 %v1393, %v1393
    %v1402 = vpack.c.bf16 %v1394, %v1394
    %v1403 = vpack.c.bf16 %v1395, %v1395
    %v1404 = vpack.c.bf16 %v1396, %v1396
    %v1405 = vpack.c.bf16 %v1397, %v1397
    %v1406 = vld [vmem:[#allocation2 + $0x2] sm:$0xff]
    %v1407 = vld [vmem:[#allocation2 + $0x12] sm:$0xff]
    %v1408 = vld [vmem:[#allocation2 + $0x22] sm:$0xff]
    %v1409 = vld [vmem:[#allocation2 + $0x32] sm:$0xff]
    %v1410 = vld [vmem:[#allocation2 + $0x62] sm:$0xff]
    %v1411 = vld [vmem:[#allocation2 + $0x72] sm:$0xff]
    %v1412 = vld [vmem:[#allocation2 + $0x82] sm:$0xff]
    %v1413 = vld [vmem:[#allocation2 + $0x92] sm:$0xff]
    %v1414 = vpack.c.bf16 %v1406, %v1406
    %v1415 = vpack.c.bf16 %v1407, %v1407
    %v1416 = vpack.c.bf16 %v1408, %v1408
    %v1417 = vpack.c.bf16 %v1409, %v1409
    %v1418 = vpack.c.bf16 %v1410, %v1410
    %v1419 = vpack.c.bf16 %v1411, %v1411
    %v1420 = vpack.c.bf16 %v1412, %v1412
    %v1421 = vpack.c.bf16 %v1413, %v1413
    %v1430 = vunpack.c.l.b16 %v1382
    %v1431 = vunpack.c.l.b16 %v1383
    %v1432 = vunpack.c.l.b16 %v1384
    %v1433 = vunpack.c.l.b16 %v1385
    %v1434 = vunpack.c.l.b16 %v1386
    %v1435 = vunpack.c.l.b16 %v1387
    %v1436 = vunpack.c.l.b16 %v1388
    %v1437 = vunpack.c.l.b16 %v1389
    %v1438 = vpack.c.b16 %v1431, %v1430
    %v1439 = vpack.c.b16 %v1433, %v1432
    %v1440 = vpack.c.b16 %v1435, %v1434
    %v1441 = vpack.c.b16 %v1437, %v1436
    %v1454 = vunpack.c.l.b16 %v1398
    %v1455 = vunpack.c.l.b16 %v1399
    %v1456 = vunpack.c.l.b16 %v1400
    %v1457 = vunpack.c.l.b16 %v1401
    %v1458 = vunpack.c.l.b16 %v1402
    %v1459 = vunpack.c.l.b16 %v1403
    %v1460 = vunpack.c.l.b16 %v1404
    %v1461 = vunpack.c.l.b16 %v1405
    %v1462 = vpack.c.b16 %v1455, %v1454
    %v1463 = vpack.c.b16 %v1457, %v1456
    %v1464 = vpack.c.b16 %v1459, %v1458
    %v1465 = vpack.c.b16 %v1461, %v1460
    %v1478 = vunpack.c.l.b16 %v1414
    %v1479 = vunpack.c.l.b16 %v1415
    %v1480 = vunpack.c.l.b16 %v1416
    %v1481 = vunpack.c.l.b16 %v1417
    %v1482 = vunpack.c.l.b16 %v1418
    %v1483 = vunpack.c.l.b16 %v1419
    %v1484 = vunpack.c.l.b16 %v1420
    %v1485 = vunpack.c.l.b16 %v1421
    %v1486 = vpack.c.b16 %v1479, %v1478
    %v1487 = vpack.c.b16 %v1481, %v1480
    %v1488 = vpack.c.b16 %v1483, %v1482
    %v1489 = vpack.c.b16 %v1485, %v1484
    %v1494 = vld [vmem:[#allocation8] sm:$0xf]
    %v1495 = vld [vmem:[#allocation8 + $0x4] sm:$0xf]
    %v1496 = vld [vmem:[#allocation8 + $0x8] sm:$0xf]
    %v1497 = vld [vmem:[#allocation8 + $0xc] sm:$0xf]
    %v1498 = vld [vmem:[#allocation8 + $0x10] sm:$0xf]
    %v1499 = vld [vmem:[#allocation8 + $0x14] sm:$0xf]
    %v1500 = vld [vmem:[#allocation8 + $0x18] sm:$0xf]
    %v1501 = vld [vmem:[#allocation8 + $0x1c] sm:$0xf]
    %v1502 = vld [vmem:[#allocation8 + $0x20] sm:$0xf]
    %v1503 = vld [vmem:[#allocation8 + $0x24] sm:$0xf]
    %v1504 = vld [vmem:[#allocation8 + $0x28] sm:$0xf]
    %v1505 = vld [vmem:[#allocation8 + $0x2c] sm:$0xf]
    %v1506 = vld [vmem:[#allocation8 + $0x30] sm:$0xf]
    %v1507 = vld [vmem:[#allocation8 + $0x34] sm:$0xf]
    %v1508 = vld [vmem:[#allocation8 + $0x38] sm:$0xf]
    %v1509 = vld [vmem:[#allocation8 + $0x3c] sm:$0xf]
    %v1510 = vld [vmem:[#allocation8 + $0x40] sm:$0xf]
    %v1511 = vld [vmem:[#allocation8 + $0x44] sm:$0xf]
    %v1512 = vld [vmem:[#allocation8 + $0x48] sm:$0xf]
    %v1513 = vld [vmem:[#allocation8 + $0x4c] sm:$0xf]
    %v1514 = vld [vmem:[#allocation8 + $0x50] sm:$0xf]
    %v1515 = vld [vmem:[#allocation8 + $0x54] sm:$0xf]
    %v1516 = vld [vmem:[#allocation8 + $0x58] sm:$0xf]
    %v1517 = vld [vmem:[#allocation8 + $0x5c] sm:$0xf]
    %v1518 = vld [vmem:[#allocation8 + $0x60] sm:$0xf]
    %v1519 = vld [vmem:[#allocation8 + $0x64] sm:$0xf]
    %v1520 = vld [vmem:[#allocation8 + $0x68] sm:$0xf]
    %v1521 = vld [vmem:[#allocation8 + $0x6c] sm:$0xf]
    %v1522 = vld [vmem:[#allocation8 + $0x70] sm:$0xf]
    %v1523 = vld [vmem:[#allocation8 + $0x74] sm:$0xf]
    %v1524 = vld [vmem:[#allocation8 + $0x78] sm:$0xf]
    %v1525 = vld [vmem:[#allocation8 + $0x7c] sm:$0xf]
    %v1526 = vld [vmem:[#allocation8 + $0x80] sm:$0xf]
    %v1527 = vld [vmem:[#allocation8 + $0x84] sm:$0xf]
    %v1528 = vld [vmem:[#allocation8 + $0x88] sm:$0xf]
    %v1529 = vld [vmem:[#allocation8 + $0x8c] sm:$0xf]
    %v1530 = vld [vmem:[#allocation8 + $0x90] sm:$0xf]
    %v1531 = vld [vmem:[#allocation8 + $0x94] sm:$0xf]
    %v1532 = vld [vmem:[#allocation8 + $0x98] sm:$0xf]
    %v1533 = vld [vmem:[#allocation8 + $0x9c] sm:$0xf]
    %v1534 = vld [vmem:[#allocation8 + $0xa0] sm:$0xf]
    %v1535 = vld [vmem:[#allocation8 + $0xa4] sm:$0xf]
    %v1536 = vld [vmem:[#allocation8 + $0xa8] sm:$0xf]
    %v1537 = vld [vmem:[#allocation8 + $0xac] sm:$0xf]
    %v1538 = vld [vmem:[#allocation8 + $0xb0] sm:$0xf]
    %v1539 = vld [vmem:[#allocation8 + $0xb4] sm:$0xf]
    %v1540 = vld [vmem:[#allocation8 + $0xb8] sm:$0xf]
    %v1541 = vld [vmem:[#allocation8 + $0xbc] sm:$0xf]
    %v1590 = vunpack.c.l.b16 %v1494
    %v1591 = vunpack.c.l.b16 %v1495
    %v1592 = vunpack.c.l.b16 %v1496
    %v1593 = vunpack.c.l.b16 %v1497
    %v1594 = vunpack.c.l.b16 %v1498
    %v1595 = vunpack.c.l.b16 %v1499
    %v1596 = vunpack.c.l.b16 %v1500
    %v1597 = vunpack.c.l.b16 %v1501
    %v1598 = vunpack.c.l.b16 %v1502
    %v1599 = vunpack.c.l.b16 %v1503
    %v1600 = vunpack.c.l.b16 %v1504
    %v1601 = vunpack.c.l.b16 %v1505
    %v1602 = vunpack.c.l.b16 %v1506
    %v1603 = vunpack.c.l.b16 %v1507
    %v1604 = vunpack.c.l.b16 %v1508
    %v1605 = vunpack.c.l.b16 %v1509
    %v1606 = vunpack.c.l.b16 %v1510
    %v1607 = vunpack.c.l.b16 %v1511
    %v1608 = vunpack.c.l.b16 %v1512
    %v1609 = vunpack.c.l.b16 %v1513
    %v1610 = vunpack.c.l.b16 %v1514
    %v1611 = vunpack.c.l.b16 %v1515
    %v1612 = vunpack.c.l.b16 %v1516
    %v1613 = vunpack.c.l.b16 %v1517
    %v1614 = vunpack.c.l.b16 %v1518
    %v1615 = vunpack.c.l.b16 %v1519
    %v1616 = vunpack.c.l.b16 %v1520
    %v1617 = vunpack.c.l.b16 %v1521
    %v1618 = vunpack.c.l.b16 %v1522
    %v1619 = vunpack.c.l.b16 %v1523
    %v1620 = vunpack.c.l.b16 %v1524
    %v1621 = vunpack.c.l.b16 %v1525
    %v1622 = vunpack.c.l.b16 %v1526
    %v1623 = vunpack.c.l.b16 %v1527
    %v1624 = vunpack.c.l.b16 %v1528
    %v1625 = vunpack.c.l.b16 %v1529
    %v1626 = vunpack.c.l.b16 %v1530
    %v1627 = vunpack.c.l.b16 %v1531
    %v1628 = vunpack.c.l.b16 %v1532
    %v1629 = vunpack.c.l.b16 %v1533
    %v1630 = vunpack.c.l.b16 %v1534
    %v1631 = vunpack.c.l.b16 %v1535
    %v1632 = vunpack.c.l.b16 %v1536
    %v1633 = vunpack.c.l.b16 %v1537
    %v1634 = vunpack.c.l.b16 %v1538
    %v1635 = vunpack.c.l.b16 %v1539
    %v1636 = vunpack.c.l.b16 %v1540
    %v1637 = vunpack.c.l.b16 %v1541
    %v1638 = vpack.c.b16 %v1591, %v1590
    %v1639 = vpack.c.b16 %v1593, %v1592
    %v1640 = vpack.c.b16 %v1595, %v1594
    %v1641 = vpack.c.b16 %v1597, %v1596
    %v1642 = vpack.c.b16 %v1599, %v1598
    %v1643 = vpack.c.b16 %v1601, %v1600
    %v1644 = vpack.c.b16 %v1603, %v1602
    %v1645 = vpack.c.b16 %v1605, %v1604
    %v1646 = vpack.c.b16 %v1607, %v1606
    %v1647 = vpack.c.b16 %v1609, %v1608
    %v1648 = vpack.c.b16 %v1611, %v1610
    %v1649 = vpack.c.b16 %v1613, %v1612
    %v1650 = vpack.c.b16 %v1615, %v1614
    %v1651 = vpack.c.b16 %v1617, %v1616
    %v1652 = vpack.c.b16 %v1619, %v1618
    %v1653 = vpack.c.b16 %v1621, %v1620
    %v1654 = vpack.c.b16 %v1623, %v1622
    %v1655 = vpack.c.b16 %v1625, %v1624
    %v1656 = vpack.c.b16 %v1627, %v1626
    %v1657 = vpack.c.b16 %v1629, %v1628
    %v1658 = vpack.c.b16 %v1631, %v1630
    %v1659 = vpack.c.b16 %v1633, %v1632
    %v1660 = vpack.c.b16 %v1635, %v1634
    %v1661 = vpack.c.b16 %v1637, %v1636
    %1686 = vmatpush.bf16.msra.mxu0 %v1645
    %1687 = vmatpush.bf16.msra.mxu0 %v1644
    %1688 = vmatpush.bf16.msra.mxu0 %v1643
    %1689 = vmatpush.bf16.msra.mxu0 %v1642
    %1690 = vmatpush.bf16.msra.mxu0 %v1641
    %1691 = vmatpush.bf16.msra.mxu0 %v1640
    %1692 = vmatpush.bf16.msra.mxu0 %v1639
    %1693 = vmatpush.bf16.msra.mxu0 %v1638
    %1694 = vmatmul.bf16.gmra.mxu0 %v1438
    %v1695 = vpop.f32.mrf.mxu0
    %v1696 = vadd.f32 0.0, %v1695
    %v1697 = vpop.f32.mrf.mxu0
    %v1698 = vadd.f32 0.0, %v1697
    %1699 = vmatmul.bf16.gmra.mxu0 %v1439
    %v1700 = vpop.f32.mrf.mxu0
    %v1701 = vadd.f32 0.0, %v1700
    %v1702 = vpop.f32.mrf.mxu0
    %v1703 = vadd.f32 0.0, %v1702
    %1704 = vmatmul.bf16.gmra.mxu0 %v1440
    %v1705 = vpop.f32.mrf.mxu0
    %v1706 = vadd.f32 0.0, %v1705
    %v1707 = vpop.f32.mrf.mxu0
    %v1708 = vadd.f32 0.0, %v1707
    %1709 = vmatmul.bf16.gmra.mxu0 %v1441
    %v1710 = vpop.f32.mrf.mxu0
    %v1711 = vadd.f32 0.0, %v1710
    %v1712 = vpop.f32.mrf.mxu0
    %v1713 = vadd.f32 0.0, %v1712
    %1714 = vdwg.mxu0
    %1715 = vmatpush.bf16.msra.mxu0 %v1653
    %1716 = vmatpush.bf16.msra.mxu0 %v1652
    %1717 = vmatpush.bf16.msra.mxu0 %v1651
    %1718 = vmatpush.bf16.msra.mxu0 %v1650
    %1719 = vmatpush.bf16.msra.mxu0 %v1649
    %1720 = vmatpush.bf16.msra.mxu0 %v1648
    %1721 = vmatpush.bf16.msra.mxu0 %v1647
    %1722 = vmatpush.bf16.msra.mxu0 %v1646
    %1723 = vmatmul.bf16.gmra.mxu0 %v1462
    %v1724 = vpop.f32.mrf.mxu0
    %v1725 = vadd.f32 %v1696, %v1724
    %v1726 = vpop.f32.mrf.mxu0
    %v1727 = vadd.f32 %v1698, %v1726
    %1728 = vmatmul.bf16.gmra.mxu0 %v1463
    %v1729 = vpop.f32.mrf.mxu0
    %v1730 = vadd.f32 %v1701, %v1729
    %v1731 = vpop.f32.mrf.mxu0
    %v1732 = vadd.f32 %v1703, %v1731
    %1733 = vmatmul.bf16.gmra.mxu0 %v1464
    %v1734 = vpop.f32.mrf.mxu0
    %v1735 = vadd.f32 %v1706, %v1734
    %v1736 = vpop.f32.mrf.mxu0
    %v1737 = vadd.f32 %v1708, %v1736
    %1738 = vmatmul.bf16.gmra.mxu0 %v1465
    %v1739 = vpop.f32.mrf.mxu0
    %v1740 = vadd.f32 %v1711, %v1739
    %v1741 = vpop.f32.mrf.mxu0
    %v1742 = vadd.f32 %v1713, %v1741
    %1743 = vdwg.mxu0
    %1744 = vmatpush.bf16.msra.mxu0 %v1661
    %1745 = vmatpush.bf16.msra.mxu0 %v1660
    %1746 = vmatpush.bf16.msra.mxu0 %v1659
    %1747 = vmatpush.bf16.msra.mxu0 %v1658
    %1748 = vmatpush.bf16.msra.mxu0 %v1657
    %1749 = vmatpush.bf16.msra.mxu0 %v1656
    %1750 = vmatpush.bf16.msra.mxu0 %v1655
    %1751 = vmatpush.bf16.msra.mxu0 %v1654
    %1752 = vmatmul.bf16.gmra.mxu0 %v1486
    %v1753 = vpop.f32.mrf.mxu0
    %v1754 = vadd.f32 %v1725, %v1753
    %v1755 = vpop.f32.mrf.mxu0
    %v1756 = vadd.f32 %v1727, %v1755
    %1757 = vmatmul.bf16.gmra.mxu0 %v1487
    %v1758 = vpop.f32.mrf.mxu0
    %v1759 = vadd.f32 %v1730, %v1758
    %v1760 = vpop.f32.mrf.mxu0
    %v1761 = vadd.f32 %v1732, %v1760
    %1762 = vmatmul.bf16.gmra.mxu0 %v1488
    %v1763 = vpop.f32.mrf.mxu0
    %v1764 = vadd.f32 %v1735, %v1763
    %v1765 = vpop.f32.mrf.mxu0
    %v1766 = vadd.f32 %v1737, %v1765
    %1767 = vmatmul.bf16.gmra.mxu0 %v1489
    %v1768 = vpop.f32.mrf.mxu0
    %v1769 = vadd.f32 %v1740, %v1768
    %v1770 = vpop.f32.mrf.mxu0
    %v1771 = vadd.f32 %v1742, %v1770
    %1772 = vdwg.mxu0
    %v1773 = vadd.f32 %v1372, %v1754
    %v1774 = vadd.f32 %v1372, %v1756
    %v1775 = vadd.f32 %v1372, %v1759
    %v1776 = vadd.f32 %v1372, %v1761
    %v1777 = vadd.f32 %v1372, %v1764
    %v1778 = vadd.f32 %v1372, %v1766
    %v1779 = vadd.f32 %v1372, %v1769
    %v1780 = vadd.f32 %v1372, %v1771
    %v1781 = vld [vmem:[%s117] sm:$0xff]
    %v1782 = vld [vmem:[%s117 + $0x10] sm:$0xff]
    %v1783 = vld [vmem:[%s117 + $0x20] sm:$0xff]
    %v1784 = vld [vmem:[%s117 + $0x30] sm:$0xff]
    %v1785 = vld [vmem:[%s117 + $0x60] sm:$0xff]
    %v1786 = vld [vmem:[%s117 + $0x70] sm:$0xff]
    %v1787 = vld [vmem:[%s117 + $0x80] sm:$0xff]
    %v1788 = vld [vmem:[%s117 + $0x90] sm:$0xff]
    %v1789 = vpack.c.bf16 %v1781, %v1781
    %v1790 = vpack.c.bf16 %v1782, %v1782
    %v1791 = vpack.c.bf16 %v1783, %v1783
    %v1792 = vpack.c.bf16 %v1784, %v1784
    %v1793 = vpack.c.bf16 %v1785, %v1785
    %v1794 = vpack.c.bf16 %v1786, %v1786
    %v1795 = vpack.c.bf16 %v1787, %v1787
    %v1796 = vpack.c.bf16 %v1788, %v1788
    %v1797 = vld [vmem:[%s117 + $0x1] sm:$0xff]
    %v1798 = vld [vmem:[%s117 + $0x11] sm:$0xff]
    %v1799 = vld [vmem:[%s117 + $0x21] sm:$0xff]
    %v1800 = vld [vmem:[%s117 + $0x31] sm:$0xff]
    %v1801 = vld [vmem:[%s117 + $0x61] sm:$0xff]
    %v1802 = vld [vmem:[%s117 + $0x71] sm:$0xff]
    %v1803 = vld [vmem:[%s117 + $0x81] sm:$0xff]
    %v1804 = vld [vmem:[%s117 + $0x91] sm:$0xff]
    %v1805 = vpack.c.bf16 %v1797, %v1797
    %v1806 = vpack.c.bf16 %v1798, %v1798
    %v1807 = vpack.c.bf16 %v1799, %v1799
    %v1808 = vpack.c.bf16 %v1800, %v1800
    %v1809 = vpack.c.bf16 %v1801, %v1801
    %v1810 = vpack.c.bf16 %v1802, %v1802
    %v1811 = vpack.c.bf16 %v1803, %v1803
    %v1812 = vpack.c.bf16 %v1804, %v1804
    %v1813 = vld [vmem:[%s117 + $0x2] sm:$0xff]
    %v1814 = vld [vmem:[%s117 + $0x12] sm:$0xff]
    %v1815 = vld [vmem:[%s117 + $0x22] sm:$0xff]
    %v1816 = vld [vmem:[%s117 + $0x32] sm:$0xff]
    %v1817 = vld [vmem:[%s117 + $0x62] sm:$0xff]
    %v1818 = vld [vmem:[%s117 + $0x72] sm:$0xff]
    %v1819 = vld [vmem:[%s117 + $0x82] sm:$0xff]
    %v1820 = vld [vmem:[%s117 + $0x92] sm:$0xff]
    %v1821 = vpack.c.bf16 %v1813, %v1813
    %v1822 = vpack.c.bf16 %v1814, %v1814
    %v1823 = vpack.c.bf16 %v1815, %v1815
    %v1824 = vpack.c.bf16 %v1816, %v1816
    %v1825 = vpack.c.bf16 %v1817, %v1817
    %v1826 = vpack.c.bf16 %v1818, %v1818
    %v1827 = vpack.c.bf16 %v1819, %v1819
    %v1828 = vpack.c.bf16 %v1820, %v1820
    %v1837 = vunpack.c.l.b16 %v1789
    %v1838 = vunpack.c.l.b16 %v1790
    %v1839 = vunpack.c.l.b16 %v1791
    %v1840 = vunpack.c.l.b16 %v1792
    %v1841 = vunpack.c.l.b16 %v1793
    %v1842 = vunpack.c.l.b16 %v1794
    %v1843 = vunpack.c.l.b16 %v1795
    %v1844 = vunpack.c.l.b16 %v1796
    %v1845 = vpack.c.b16 %v1838, %v1837
    %v1846 = vpack.c.b16 %v1840, %v1839
    %v1847 = vpack.c.b16 %v1842, %v1841
    %v1848 = vpack.c.b16 %v1844, %v1843
    %v1861 = vunpack.c.l.b16 %v1805
    %v1862 = vunpack.c.l.b16 %v1806
    %v1863 = vunpack.c.l.b16 %v1807
    %v1864 = vunpack.c.l.b16 %v1808
    %v1865 = vunpack.c.l.b16 %v1809
    %v1866 = vunpack.c.l.b16 %v1810
    %v1867 = vunpack.c.l.b16 %v1811
    %v1868 = vunpack.c.l.b16 %v1812
    %v1869 = vpack.c.b16 %v1862, %v1861
    %v1870 = vpack.c.b16 %v1864, %v1863
    %v1871 = vpack.c.b16 %v1866, %v1865
    %v1872 = vpack.c.b16 %v1868, %v1867
    %v1885 = vunpack.c.l.b16 %v1821
    %v1886 = vunpack.c.l.b16 %v1822
    %v1887 = vunpack.c.l.b16 %v1823
    %v1888 = vunpack.c.l.b16 %v1824
    %v1889 = vunpack.c.l.b16 %v1825
    %v1890 = vunpack.c.l.b16 %v1826
    %v1891 = vunpack.c.l.b16 %v1827
    %v1892 = vunpack.c.l.b16 %v1828
    %v1893 = vpack.c.b16 %v1886, %v1885
    %v1894 = vpack.c.b16 %v1888, %v1887
    %v1895 = vpack.c.b16 %v1890, %v1889
    %v1896 = vpack.c.b16 %v1892, %v1891
    %s1901 = scalar_lea.vmem [#allocation8], 192
    %v1902 = vld [vmem:[%s1901] sm:$0xf]
    %v1903 = vld [vmem:[%s1901 + $0x4] sm:$0xf]
    %v1904 = vld [vmem:[%s1901 + $0x8] sm:$0xf]
    %v1905 = vld [vmem:[%s1901 + $0xc] sm:$0xf]
    %v1906 = vld [vmem:[%s1901 + $0x10] sm:$0xf]
    %v1907 = vld [vmem:[%s1901 + $0x14] sm:$0xf]
    %v1908 = vld [vmem:[%s1901 + $0x18] sm:$0xf]
    %v1909 = vld [vmem:[%s1901 + $0x1c] sm:$0xf]
    %v1910 = vld [vmem:[%s1901 + $0x20] sm:$0xf]
    %v1911 = vld [vmem:[%s1901 + $0x24] sm:$0xf]
    %v1912 = vld [vmem:[%s1901 + $0x28] sm:$0xf]
    %v1913 = vld [vmem:[%s1901 + $0x2c] sm:$0xf]
    %v1914 = vld [vmem:[%s1901 + $0x30] sm:$0xf]
    %v1915 = vld [vmem:[%s1901 + $0x34] sm:$0xf]
    %v1916 = vld [vmem:[%s1901 + $0x38] sm:$0xf]
    %v1917 = vld [vmem:[%s1901 + $0x3c] sm:$0xf]
    %v1918 = vld [vmem:[%s1901 + $0x40] sm:$0xf]
    %v1919 = vld [vmem:[%s1901 + $0x44] sm:$0xf]
    %v1920 = vld [vmem:[%s1901 + $0x48] sm:$0xf]
    %v1921 = vld [vmem:[%s1901 + $0x4c] sm:$0xf]
    %v1922 = vld [vmem:[%s1901 + $0x50] sm:$0xf]
    %v1923 = vld [vmem:[%s1901 + $0x54] sm:$0xf]
    %v1924 = vld [vmem:[%s1901 + $0x58] sm:$0xf]
    %v1925 = vld [vmem:[%s1901 + $0x5c] sm:$0xf]
    %v1926 = vld [vmem:[%s1901 + $0x60] sm:$0xf]
    %v1927 = vld [vmem:[%s1901 + $0x64] sm:$0xf]
    %v1928 = vld [vmem:[%s1901 + $0x68] sm:$0xf]
    %v1929 = vld [vmem:[%s1901 + $0x6c] sm:$0xf]
    %v1930 = vld [vmem:[%s1901 + $0x70] sm:$0xf]
    %v1931 = vld [vmem:[%s1901 + $0x74] sm:$0xf]
    %v1932 = vld [vmem:[%s1901 + $0x78] sm:$0xf]
    %v1933 = vld [vmem:[%s1901 + $0x7c] sm:$0xf]
    %v1934 = vld [vmem:[%s1901 + $0x80] sm:$0xf]
    %v1935 = vld [vmem:[%s1901 + $0x84] sm:$0xf]
    %v1936 = vld [vmem:[%s1901 + $0x88] sm:$0xf]
    %v1937 = vld [vmem:[%s1901 + $0x8c] sm:$0xf]
    %v1938 = vld [vmem:[%s1901 + $0x90] sm:$0xf]
    %v1939 = vld [vmem:[%s1901 + $0x94] sm:$0xf]
    %v1940 = vld [vmem:[%s1901 + $0x98] sm:$0xf]
    %v1941 = vld [vmem:[%s1901 + $0x9c] sm:$0xf]
    %v1942 = vld [vmem:[%s1901 + $0xa0] sm:$0xf]
    %v1943 = vld [vmem:[%s1901 + $0xa4] sm:$0xf]
    %v1944 = vld [vmem:[%s1901 + $0xa8] sm:$0xf]
    %v1945 = vld [vmem:[%s1901 + $0xac] sm:$0xf]
    %v1946 = vld [vmem:[%s1901 + $0xb0] sm:$0xf]
    %v1947 = vld [vmem:[%s1901 + $0xb4] sm:$0xf]
    %v1948 = vld [vmem:[%s1901 + $0xb8] sm:$0xf]
    %v1949 = vld [vmem:[%s1901 + $0xbc] sm:$0xf]
    %v1998 = vunpack.c.l.b16 %v1902
    %v1999 = vunpack.c.l.b16 %v1903
    %v2000 = vunpack.c.l.b16 %v1904
    %v2001 = vunpack.c.l.b16 %v1905
    %v2002 = vunpack.c.l.b16 %v1906
    %v2003 = vunpack.c.l.b16 %v1907
    %v2004 = vunpack.c.l.b16 %v1908
    %v2005 = vunpack.c.l.b16 %v1909
    %v2006 = vunpack.c.l.b16 %v1910
    %v2007 = vunpack.c.l.b16 %v1911
    %v2008 = vunpack.c.l.b16 %v1912
    %v2009 = vunpack.c.l.b16 %v1913
    %v2010 = vunpack.c.l.b16 %v1914
    %v2011 = vunpack.c.l.b16 %v1915
    %v2012 = vunpack.c.l.b16 %v1916
    %v2013 = vunpack.c.l.b16 %v1917
    %v2014 = vunpack.c.l.b16 %v1918
    %v2015 = vunpack.c.l.b16 %v1919
    %v2016 = vunpack.c.l.b16 %v1920
    %v2017 = vunpack.c.l.b16 %v1921
    %v2018 = vunpack.c.l.b16 %v1922
    %v2019 = vunpack.c.l.b16 %v1923
    %v2020 = vunpack.c.l.b16 %v1924
    %v2021 = vunpack.c.l.b16 %v1925
    %v2022 = vunpack.c.l.b16 %v1926
    %v2023 = vunpack.c.l.b16 %v1927
    %v2024 = vunpack.c.l.b16 %v1928
    %v2025 = vunpack.c.l.b16 %v1929
    %v2026 = vunpack.c.l.b16 %v1930
    %v2027 = vunpack.c.l.b16 %v1931
    %v2028 = vunpack.c.l.b16 %v1932
    %v2029 = vunpack.c.l.b16 %v1933
    %v2030 = vunpack.c.l.b16 %v1934
    %v2031 = vunpack.c.l.b16 %v1935
    %v2032 = vunpack.c.l.b16 %v1936
    %v2033 = vunpack.c.l.b16 %v1937
    %v2034 = vunpack.c.l.b16 %v1938
    %v2035 = vunpack.c.l.b16 %v1939
    %v2036 = vunpack.c.l.b16 %v1940
    %v2037 = vunpack.c.l.b16 %v1941
    %v2038 = vunpack.c.l.b16 %v1942
    %v2039 = vunpack.c.l.b16 %v1943
    %v2040 = vunpack.c.l.b16 %v1944
    %v2041 = vunpack.c.l.b16 %v1945
    %v2042 = vunpack.c.l.b16 %v1946
    %v2043 = vunpack.c.l.b16 %v1947
    %v2044 = vunpack.c.l.b16 %v1948
    %v2045 = vunpack.c.l.b16 %v1949
    %v2046 = vpack.c.b16 %v1999, %v1998
    %v2047 = vpack.c.b16 %v2001, %v2000
    %v2048 = vpack.c.b16 %v2003, %v2002
    %v2049 = vpack.c.b16 %v2005, %v2004
    %v2050 = vpack.c.b16 %v2007, %v2006
    %v2051 = vpack.c.b16 %v2009, %v2008
    %v2052 = vpack.c.b16 %v2011, %v2010
    %v2053 = vpack.c.b16 %v2013, %v2012
    %v2054 = vpack.c.b16 %v2015, %v2014
    %v2055 = vpack.c.b16 %v2017, %v2016
    %v2056 = vpack.c.b16 %v2019, %v2018
    %v2057 = vpack.c.b16 %v2021, %v2020
    %v2058 = vpack.c.b16 %v2023, %v2022
    %v2059 = vpack.c.b16 %v2025, %v2024
    %v2060 = vpack.c.b16 %v2027, %v2026
    %v2061 = vpack.c.b16 %v2029, %v2028
    %v2062 = vpack.c.b16 %v2031, %v2030
    %v2063 = vpack.c.b16 %v2033, %v2032
    %v2064 = vpack.c.b16 %v2035, %v2034
    %v2065 = vpack.c.b16 %v2037, %v2036
    %v2066 = vpack.c.b16 %v2039, %v2038
    %v2067 = vpack.c.b16 %v2041, %v2040
    %v2068 = vpack.c.b16 %v2043, %v2042
    %v2069 = vpack.c.b16 %v2045, %v2044
    %2094 = vmatpush.bf16.msra.mxu0 %v2053
    %2095 = vmatpush.bf16.msra.mxu0 %v2052
    %2096 = vmatpush.bf16.msra.mxu0 %v2051
    %2097 = vmatpush.bf16.msra.mxu0 %v2050
    %2098 = vmatpush.bf16.msra.mxu0 %v2049
    %2099 = vmatpush.bf16.msra.mxu0 %v2048
    %2100 = vmatpush.bf16.msra.mxu0 %v2047
    %2101 = vmatpush.bf16.msra.mxu0 %v2046
    %2102 = vmatmul.bf16.gmra.mxu0 %v1845
    %v2103 = vpop.f32.mrf.mxu0
    %v2104 = vadd.f32 0.0, %v2103
    %v2105 = vpop.f32.mrf.mxu0
    %v2106 = vadd.f32 0.0, %v2105
    %2107 = vmatmul.bf16.gmra.mxu0 %v1846
    %v2108 = vpop.f32.mrf.mxu0
    %v2109 = vadd.f32 0.0, %v2108
    %v2110 = vpop.f32.mrf.mxu0
    %v2111 = vadd.f32 0.0, %v2110
    %2112 = vmatmul.bf16.gmra.mxu0 %v1847
    %v2113 = vpop.f32.mrf.mxu0
    %v2114 = vadd.f32 0.0, %v2113
    %v2115 = vpop.f32.mrf.mxu0
    %v2116 = vadd.f32 0.0, %v2115
    %2117 = vmatmul.bf16.gmra.mxu0 %v1848
    %v2118 = vpop.f32.mrf.mxu0
    %v2119 = vadd.f32 0.0, %v2118
    %v2120 = vpop.f32.mrf.mxu0
    %v2121 = vadd.f32 0.0, %v2120
    %2122 = vdwg.mxu0
    %2123 = vmatpush.bf16.msra.mxu0 %v2061
    %2124 = vmatpush.bf16.msra.mxu0 %v2060
    %2125 = vmatpush.bf16.msra.mxu0 %v2059
    %2126 = vmatpush.bf16.msra.mxu0 %v2058
    %2127 = vmatpush.bf16.msra.mxu0 %v2057
    %2128 = vmatpush.bf16.msra.mxu0 %v2056
    %2129 = vmatpush.bf16.msra.mxu0 %v2055
    %2130 = vmatpush.bf16.msra.mxu0 %v2054
    %2131 = vmatmul.bf16.gmra.mxu0 %v1869
    %v2132 = vpop.f32.mrf.mxu0
    %v2133 = vadd.f32 %v2104, %v2132
    %v2134 = vpop.f32.mrf.mxu0
    %v2135 = vadd.f32 %v2106, %v2134
    %2136 = vmatmul.bf16.gmra.mxu0 %v1870
    %v2137 = vpop.f32.mrf.mxu0
    %v2138 = vadd.f32 %v2109, %v2137
    %v2139 = vpop.f32.mrf.mxu0
    %v2140 = vadd.f32 %v2111, %v2139
    %2141 = vmatmul.bf16.gmra.mxu0 %v1871
    %v2142 = vpop.f32.mrf.mxu0
    %v2143 = vadd.f32 %v2114, %v2142
    %v2144 = vpop.f32.mrf.mxu0
    %v2145 = vadd.f32 %v2116, %v2144
    %2146 = vmatmul.bf16.gmra.mxu0 %v1872
    %v2147 = vpop.f32.mrf.mxu0
    %v2148 = vadd.f32 %v2119, %v2147
    %v2149 = vpop.f32.mrf.mxu0
    %v2150 = vadd.f32 %v2121, %v2149
    %2151 = vdwg.mxu0
    %2152 = vmatpush.bf16.msra.mxu0 %v2069
    %2153 = vmatpush.bf16.msra.mxu0 %v2068
    %2154 = vmatpush.bf16.msra.mxu0 %v2067
    %2155 = vmatpush.bf16.msra.mxu0 %v2066
    %2156 = vmatpush.bf16.msra.mxu0 %v2065
    %2157 = vmatpush.bf16.msra.mxu0 %v2064
    %2158 = vmatpush.bf16.msra.mxu0 %v2063
    %2159 = vmatpush.bf16.msra.mxu0 %v2062
    %2160 = vmatmul.bf16.gmra.mxu0 %v1893
    %v2161 = vpop.f32.mrf.mxu0
    %v2162 = vadd.f32 %v2133, %v2161
    %v2163 = vpop.f32.mrf.mxu0
    %v2164 = vadd.f32 %v2135, %v2163
    %2165 = vmatmul.bf16.gmra.mxu0 %v1894
    %v2166 = vpop.f32.mrf.mxu0
    %v2167 = vadd.f32 %v2138, %v2166
    %v2168 = vpop.f32.mrf.mxu0
    %v2169 = vadd.f32 %v2140, %v2168
    %2170 = vmatmul.bf16.gmra.mxu0 %v1895
    %v2171 = vpop.f32.mrf.mxu0
    %v2172 = vadd.f32 %v2143, %v2171
    %v2173 = vpop.f32.mrf.mxu0
    %v2174 = vadd.f32 %v2145, %v2173
    %2175 = vmatmul.bf16.gmra.mxu0 %v1896
    %v2176 = vpop.f32.mrf.mxu0
    %v2177 = vadd.f32 %v2148, %v2176
    %v2178 = vpop.f32.mrf.mxu0
    %v2179 = vadd.f32 %v2150, %v2178
    %2180 = vdwg.mxu0
    %v2181 = vadd.f32 %v1773, %v2162
    %v2182 = vadd.f32 %v1774, %v2164
    %v2183 = vadd.f32 %v1775, %v2167
    %v2184 = vadd.f32 %v1776, %v2169
    %v2185 = vadd.f32 %v1777, %v2172
    %v2186 = vadd.f32 %v1778, %v2174
    %v2187 = vadd.f32 %v1779, %v2177
    %v2188 = vadd.f32 %v1780, %v2179
    %v2189 = vld [vmem:[%s945] sm:$0xff]
    %v2190 = vld [vmem:[%s945 + $0x10] sm:$0xff]
    %v2191 = vld [vmem:[%s945 + $0x20] sm:$0xff]
    %v2192 = vld [vmem:[%s945 + $0x30] sm:$0xff]
    %v2193 = vld [vmem:[%s945 + $0x60] sm:$0xff]
    %v2194 = vld [vmem:[%s945 + $0x70] sm:$0xff]
    %v2195 = vld [vmem:[%s945 + $0x80] sm:$0xff]
    %v2196 = vld [vmem:[%s945 + $0x90] sm:$0xff]
    %v2197 = vpack.c.bf16 %v2189, %v2189
    %v2198 = vpack.c.bf16 %v2190, %v2190
    %v2199 = vpack.c.bf16 %v2191, %v2191
    %v2200 = vpack.c.bf16 %v2192, %v2192
    %v2201 = vpack.c.bf16 %v2193, %v2193
    %v2202 = vpack.c.bf16 %v2194, %v2194
    %v2203 = vpack.c.bf16 %v2195, %v2195
    %v2204 = vpack.c.bf16 %v2196, %v2196
    %v2205 = vld [vmem:[%s945 + $0x1] sm:$0xff]
    %v2206 = vld [vmem:[%s945 + $0x11] sm:$0xff]
    %v2207 = vld [vmem:[%s945 + $0x21] sm:$0xff]
    %v2208 = vld [vmem:[%s945 + $0x31] sm:$0xff]
    %v2209 = vld [vmem:[%s945 + $0x61] sm:$0xff]
    %v2210 = vld [vmem:[%s945 + $0x71] sm:$0xff]
    %v2211 = vld [vmem:[%s945 + $0x81] sm:$0xff]
    %v2212 = vld [vmem:[%s945 + $0x91] sm:$0xff]
    %v2213 = vpack.c.bf16 %v2205, %v2205
    %v2214 = vpack.c.bf16 %v2206, %v2206
    %v2215 = vpack.c.bf16 %v2207, %v2207
    %v2216 = vpack.c.bf16 %v2208, %v2208
    %v2217 = vpack.c.bf16 %v2209, %v2209
    %v2218 = vpack.c.bf16 %v2210, %v2210
    %v2219 = vpack.c.bf16 %v2211, %v2211
    %v2220 = vpack.c.bf16 %v2212, %v2212
    %v2221 = vld [vmem:[%s945 + $0x2] sm:$0xff]
    %v2222 = vld [vmem:[%s945 + $0x12] sm:$0xff]
    %v2223 = vld [vmem:[%s945 + $0x22] sm:$0xff]
    %v2224 = vld [vmem:[%s945 + $0x32] sm:$0xff]
    %v2225 = vld [vmem:[%s945 + $0x62] sm:$0xff]
    %v2226 = vld [vmem:[%s945 + $0x72] sm:$0xff]
    %v2227 = vld [vmem:[%s945 + $0x82] sm:$0xff]
    %v2228 = vld [vmem:[%s945 + $0x92] sm:$0xff]
    %v2229 = vpack.c.bf16 %v2221, %v2221
    %v2230 = vpack.c.bf16 %v2222, %v2222
    %v2231 = vpack.c.bf16 %v2223, %v2223
    %v2232 = vpack.c.bf16 %v2224, %v2224
    %v2233 = vpack.c.bf16 %v2225, %v2225
    %v2234 = vpack.c.bf16 %v2226, %v2226
    %v2235 = vpack.c.bf16 %v2227, %v2227
    %v2236 = vpack.c.bf16 %v2228, %v2228
    %v2245 = vunpack.c.l.b16 %v2197
    %v2246 = vunpack.c.l.b16 %v2198
    %v2247 = vunpack.c.l.b16 %v2199
    %v2248 = vunpack.c.l.b16 %v2200
    %v2249 = vunpack.c.l.b16 %v2201
    %v2250 = vunpack.c.l.b16 %v2202
    %v2251 = vunpack.c.l.b16 %v2203
    %v2252 = vunpack.c.l.b16 %v2204
    %v2253 = vpack.c.b16 %v2246, %v2245
    %v2254 = vpack.c.b16 %v2248, %v2247
    %v2255 = vpack.c.b16 %v2250, %v2249
    %v2256 = vpack.c.b16 %v2252, %v2251
    %v2269 = vunpack.c.l.b16 %v2213
    %v2270 = vunpack.c.l.b16 %v2214
    %v2271 = vunpack.c.l.b16 %v2215
    %v2272 = vunpack.c.l.b16 %v2216
    %v2273 = vunpack.c.l.b16 %v2217
    %v2274 = vunpack.c.l.b16 %v2218
    %v2275 = vunpack.c.l.b16 %v2219
    %v2276 = vunpack.c.l.b16 %v2220
    %v2277 = vpack.c.b16 %v2270, %v2269
    %v2278 = vpack.c.b16 %v2272, %v2271
    %v2279 = vpack.c.b16 %v2274, %v2273
    %v2280 = vpack.c.b16 %v2276, %v2275
    %v2293 = vunpack.c.l.b16 %v2229
    %v2294 = vunpack.c.l.b16 %v2230
    %v2295 = vunpack.c.l.b16 %v2231
    %v2296 = vunpack.c.l.b16 %v2232
    %v2297 = vunpack.c.l.b16 %v2233
    %v2298 = vunpack.c.l.b16 %v2234
    %v2299 = vunpack.c.l.b16 %v2235
    %v2300 = vunpack.c.l.b16 %v2236
    %v2301 = vpack.c.b16 %v2294, %v2293
    %v2302 = vpack.c.b16 %v2296, %v2295
    %v2303 = vpack.c.b16 %v2298, %v2297
    %v2304 = vpack.c.b16 %v2300, %v2299
    %s2309 = scalar_lea.vmem [#allocation8], 384
    %v2310 = vld [vmem:[%s2309] sm:$0xf]
    %v2311 = vld [vmem:[%s2309 + $0x4] sm:$0xf]
    %v2312 = vld [vmem:[%s2309 + $0x8] sm:$0xf]
    %v2313 = vld [vmem:[%s2309 + $0xc] sm:$0xf]
    %v2314 = vld [vmem:[%s2309 + $0x10] sm:$0xf]
    %v2315 = vld [vmem:[%s2309 + $0x14] sm:$0xf]
    %v2316 = vld [vmem:[%s2309 + $0x18] sm:$0xf]
    %v2317 = vld [vmem:[%s2309 + $0x1c] sm:$0xf]
    %v2318 = vld [vmem:[%s2309 + $0x20] sm:$0xf]
    %v2319 = vld [vmem:[%s2309 + $0x24] sm:$0xf]
    %v2320 = vld [vmem:[%s2309 + $0x28] sm:$0xf]
    %v2321 = vld [vmem:[%s2309 + $0x2c] sm:$0xf]
    %v2322 = vld [vmem:[%s2309 + $0x30] sm:$0xf]
    %v2323 = vld [vmem:[%s2309 + $0x34] sm:$0xf]
    %v2324 = vld [vmem:[%s2309 + $0x38] sm:$0xf]
    %v2325 = vld [vmem:[%s2309 + $0x3c] sm:$0xf]
    %v2326 = vld [vmem:[%s2309 + $0x40] sm:$0xf]
    %v2327 = vld [vmem:[%s2309 + $0x44] sm:$0xf]
    %v2328 = vld [vmem:[%s2309 + $0x48] sm:$0xf]
    %v2329 = vld [vmem:[%s2309 + $0x4c] sm:$0xf]
    %v2330 = vld [vmem:[%s2309 + $0x50] sm:$0xf]
    %v2331 = vld [vmem:[%s2309 + $0x54] sm:$0xf]
    %v2332 = vld [vmem:[%s2309 + $0x58] sm:$0xf]
    %v2333 = vld [vmem:[%s2309 + $0x5c] sm:$0xf]
    %v2334 = vld [vmem:[%s2309 + $0x60] sm:$0xf]
    %v2335 = vld [vmem:[%s2309 + $0x64] sm:$0xf]
    %v2336 = vld [vmem:[%s2309 + $0x68] sm:$0xf]
    %v2337 = vld [vmem:[%s2309 + $0x6c] sm:$0xf]
    %v2338 = vld [vmem:[%s2309 + $0x70] sm:$0xf]
    %v2339 = vld [vmem:[%s2309 + $0x74] sm:$0xf]
    %v2340 = vld [vmem:[%s2309 + $0x78] sm:$0xf]
    %v2341 = vld [vmem:[%s2309 + $0x7c] sm:$0xf]
    %v2342 = vld [vmem:[%s2309 + $0x80] sm:$0xf]
    %v2343 = vld [vmem:[%s2309 + $0x84] sm:$0xf]
    %v2344 = vld [vmem:[%s2309 + $0x88] sm:$0xf]
    %v2345 = vld [vmem:[%s2309 + $0x8c] sm:$0xf]
    %v2346 = vld [vmem:[%s2309 + $0x90] sm:$0xf]
    %v2347 = vld [vmem:[%s2309 + $0x94] sm:$0xf]
    %v2348 = vld [vmem:[%s2309 + $0x98] sm:$0xf]
    %v2349 = vld [vmem:[%s2309 + $0x9c] sm:$0xf]
    %v2350 = vld [vmem:[%s2309 + $0xa0] sm:$0xf]
    %v2351 = vld [vmem:[%s2309 + $0xa4] sm:$0xf]
    %v2352 = vld [vmem:[%s2309 + $0xa8] sm:$0xf]
    %v2353 = vld [vmem:[%s2309 + $0xac] sm:$0xf]
    %v2354 = vld [vmem:[%s2309 + $0xb0] sm:$0xf]
    %v2355 = vld [vmem:[%s2309 + $0xb4] sm:$0xf]
    %v2356 = vld [vmem:[%s2309 + $0xb8] sm:$0xf]
    %v2357 = vld [vmem:[%s2309 + $0xbc] sm:$0xf]
    %v2406 = vunpack.c.l.b16 %v2310
    %v2407 = vunpack.c.l.b16 %v2311
    %v2408 = vunpack.c.l.b16 %v2312
    %v2409 = vunpack.c.l.b16 %v2313
    %v2410 = vunpack.c.l.b16 %v2314
    %v2411 = vunpack.c.l.b16 %v2315
    %v2412 = vunpack.c.l.b16 %v2316
    %v2413 = vunpack.c.l.b16 %v2317
    %v2414 = vunpack.c.l.b16 %v2318
    %v2415 = vunpack.c.l.b16 %v2319
    %v2416 = vunpack.c.l.b16 %v2320
    %v2417 = vunpack.c.l.b16 %v2321
    %v2418 = vunpack.c.l.b16 %v2322
    %v2419 = vunpack.c.l.b16 %v2323
    %v2420 = vunpack.c.l.b16 %v2324
    %v2421 = vunpack.c.l.b16 %v2325
    %v2422 = vunpack.c.l.b16 %v2326
    %v2423 = vunpack.c.l.b16 %v2327
    %v2424 = vunpack.c.l.b16 %v2328
    %v2425 = vunpack.c.l.b16 %v2329
    %v2426 = vunpack.c.l.b16 %v2330
    %v2427 = vunpack.c.l.b16 %v2331
    %v2428 = vunpack.c.l.b16 %v2332
    %v2429 = vunpack.c.l.b16 %v2333
    %v2430 = vunpack.c.l.b16 %v2334
    %v2431 = vunpack.c.l.b16 %v2335
    %v2432 = vunpack.c.l.b16 %v2336
    %v2433 = vunpack.c.l.b16 %v2337
    %v2434 = vunpack.c.l.b16 %v2338
    %v2435 = vunpack.c.l.b16 %v2339
    %v2436 = vunpack.c.l.b16 %v2340
    %v2437 = vunpack.c.l.b16 %v2341
    %v2438 = vunpack.c.l.b16 %v2342
    %v2439 = vunpack.c.l.b16 %v2343
    %v2440 = vunpack.c.l.b16 %v2344
    %v2441 = vunpack.c.l.b16 %v2345
    %v2442 = vunpack.c.l.b16 %v2346
    %v2443 = vunpack.c.l.b16 %v2347
    %v2444 = vunpack.c.l.b16 %v2348
    %v2445 = vunpack.c.l.b16 %v2349
    %v2446 = vunpack.c.l.b16 %v2350
    %v2447 = vunpack.c.l.b16 %v2351
    %v2448 = vunpack.c.l.b16 %v2352
    %v2449 = vunpack.c.l.b16 %v2353
    %v2450 = vunpack.c.l.b16 %v2354
    %v2451 = vunpack.c.l.b16 %v2355
    %v2452 = vunpack.c.l.b16 %v2356
    %v2453 = vunpack.c.l.b16 %v2357
    %v2454 = vpack.c.b16 %v2407, %v2406
    %v2455 = vpack.c.b16 %v2409, %v2408
    %v2456 = vpack.c.b16 %v2411, %v2410
    %v2457 = vpack.c.b16 %v2413, %v2412
    %v2458 = vpack.c.b16 %v2415, %v2414
    %v2459 = vpack.c.b16 %v2417, %v2416
    %v2460 = vpack.c.b16 %v2419, %v2418
    %v2461 = vpack.c.b16 %v2421, %v2420
    %v2462 = vpack.c.b16 %v2423, %v2422
    %v2463 = vpack.c.b16 %v2425, %v2424
    %v2464 = vpack.c.b16 %v2427, %v2426
    %v2465 = vpack.c.b16 %v2429, %v2428
    %v2466 = vpack.c.b16 %v2431, %v2430
    %v2467 = vpack.c.b16 %v2433, %v2432
    %v2468 = vpack.c.b16 %v2435, %v2434
    %v2469 = vpack.c.b16 %v2437, %v2436
    %v2470 = vpack.c.b16 %v2439, %v2438
    %v2471 = vpack.c.b16 %v2441, %v2440
    %v2472 = vpack.c.b16 %v2443, %v2442
    %v2473 = vpack.c.b16 %v2445, %v2444
    %v2474 = vpack.c.b16 %v2447, %v2446
    %v2475 = vpack.c.b16 %v2449, %v2448
    %v2476 = vpack.c.b16 %v2451, %v2450
    %v2477 = vpack.c.b16 %v2453, %v2452
    %2502 = vmatpush.bf16.msra.mxu0 %v2461
    %2503 = vmatpush.bf16.msra.mxu0 %v2460
    %2504 = vmatpush.bf16.msra.mxu0 %v2459
    %2505 = vmatpush.bf16.msra.mxu0 %v2458
    %2506 = vmatpush.bf16.msra.mxu0 %v2457
    %2507 = vmatpush.bf16.msra.mxu0 %v2456
    %2508 = vmatpush.bf16.msra.mxu0 %v2455
    %2509 = vmatpush.bf16.msra.mxu0 %v2454
    %2510 = vmatmul.bf16.gmra.mxu0 %v2253
    %v2511 = vpop.f32.mrf.mxu0
    %v2512 = vadd.f32 0.0, %v2511
    %v2513 = vpop.f32.mrf.mxu0
    %v2514 = vadd.f32 0.0, %v2513
    %2515 = vmatmul.bf16.gmra.mxu0 %v2254
    %v2516 = vpop.f32.mrf.mxu0
    %v2517 = vadd.f32 0.0, %v2516
    %v2518 = vpop.f32.mrf.mxu0
    %v2519 = vadd.f32 0.0, %v2518
    %2520 = vmatmul.bf16.gmra.mxu0 %v2255
    %v2521 = vpop.f32.mrf.mxu0
    %v2522 = vadd.f32 0.0, %v2521
    %v2523 = vpop.f32.mrf.mxu0
    %v2524 = vadd.f32 0.0, %v2523
    %2525 = vmatmul.bf16.gmra.mxu0 %v2256
    %v2526 = vpop.f32.mrf.mxu0
    %v2527 = vadd.f32 0.0, %v2526
    %v2528 = vpop.f32.mrf.mxu0
    %v2529 = vadd.f32 0.0, %v2528
    %2530 = vdwg.mxu0
    %2531 = vmatpush.bf16.msra.mxu0 %v2469
    %2532 = vmatpush.bf16.msra.mxu0 %v2468
    %2533 = vmatpush.bf16.msra.mxu0 %v2467
    %2534 = vmatpush.bf16.msra.mxu0 %v2466
    %2535 = vmatpush.bf16.msra.mxu0 %v2465
    %2536 = vmatpush.bf16.msra.mxu0 %v2464
    %2537 = vmatpush.bf16.msra.mxu0 %v2463
    %2538 = vmatpush.bf16.msra.mxu0 %v2462
    %2539 = vmatmul.bf16.gmra.mxu0 %v2277
    %v2540 = vpop.f32.mrf.mxu0
    %v2541 = vadd.f32 %v2512, %v2540
    %v2542 = vpop.f32.mrf.mxu0
    %v2543 = vadd.f32 %v2514, %v2542
    %2544 = vmatmul.bf16.gmra.mxu0 %v2278
    %v2545 = vpop.f32.mrf.mxu0
    %v2546 = vadd.f32 %v2517, %v2545
    %v2547 = vpop.f32.mrf.mxu0
    %v2548 = vadd.f32 %v2519, %v2547
    %2549 = vmatmul.bf16.gmra.mxu0 %v2279
    %v2550 = vpop.f32.mrf.mxu0
    %v2551 = vadd.f32 %v2522, %v2550
    %v2552 = vpop.f32.mrf.mxu0
    %v2553 = vadd.f32 %v2524, %v2552
    %2554 = vmatmul.bf16.gmra.mxu0 %v2280
    %v2555 = vpop.f32.mrf.mxu0
    %v2556 = vadd.f32 %v2527, %v2555
    %v2557 = vpop.f32.mrf.mxu0
    %v2558 = vadd.f32 %v2529, %v2557
    %2559 = vdwg.mxu0
    %2560 = vmatpush.bf16.msra.mxu0 %v2477
    %2561 = vmatpush.bf16.msra.mxu0 %v2476
    %2562 = vmatpush.bf16.msra.mxu0 %v2475
    %2563 = vmatpush.bf16.msra.mxu0 %v2474
    %2564 = vmatpush.bf16.msra.mxu0 %v2473
    %2565 = vmatpush.bf16.msra.mxu0 %v2472
    %2566 = vmatpush.bf16.msra.mxu0 %v2471
    %2567 = vmatpush.bf16.msra.mxu0 %v2470
    %2568 = vmatmul.bf16.gmra.mxu0 %v2301
    %v2569 = vpop.f32.mrf.mxu0
    %v2570 = vadd.f32 %v2541, %v2569
    %v2571 = vpop.f32.mrf.mxu0
    %v2572 = vadd.f32 %v2543, %v2571
    %2573 = vmatmul.bf16.gmra.mxu0 %v2302
    %v2574 = vpop.f32.mrf.mxu0
    %v2575 = vadd.f32 %v2546, %v2574
    %v2576 = vpop.f32.mrf.mxu0
    %v2577 = vadd.f32 %v2548, %v2576
    %2578 = vmatmul.bf16.gmra.mxu0 %v2303
    %v2579 = vpop.f32.mrf.mxu0
    %v2580 = vadd.f32 %v2551, %v2579
    %v2581 = vpop.f32.mrf.mxu0
    %v2582 = vadd.f32 %v2553, %v2581
    %2583 = vmatmul.bf16.gmra.mxu0 %v2304
    %v2584 = vpop.f32.mrf.mxu0
    %v2585 = vadd.f32 %v2556, %v2584
    %v2586 = vpop.f32.mrf.mxu0
    %v2587 = vadd.f32 %v2558, %v2586
    %2588 = vdwg.mxu0
    %v2589 = vadd.f32 %v2181, %v2570
    %v2590 = vadd.f32 %v2182, %v2572
    %v2591 = vadd.f32 %v2183, %v2575
    %v2592 = vadd.f32 %v2184, %v2577
    %v2593 = vadd.f32 %v2185, %v2580
    %v2594 = vadd.f32 %v2186, %v2582
    %v2595 = vadd.f32 %v2187, %v2585
    %v2596 = vadd.f32 %v2188, %v2587
    %v2597 = vadd.f32 %v2589, %v101
    %v2598 = vadd.f32 %v2590, %v102
    %v2599 = vadd.f32 %v2591, %v103
    %v2600 = vadd.f32 %v2592, %v104
    %v2601 = vadd.f32 %v2593, %v105
    %v2602 = vadd.f32 %v2594, %v106
    %v2603 = vadd.f32 %v2595, %v107
    %v2604 = vadd.f32 %v2596, %v108
    %2605 = vst [vmem:[#allocation9] sm:$0xff] %v2597
    %2606 = vst [vmem:[#allocation9 + $0x8] sm:$0xff] %v2598
    %2607 = vst [vmem:[#allocation9 + $0x10] sm:$0xff] %v2599
    %2608 = vst [vmem:[#allocation9 + $0x18] sm:$0xff] %v2600
    %2609 = vst [vmem:[#allocation9 + $0x20] sm:$0xff] %v2601
    %2610 = vst [vmem:[#allocation9 + $0x28] sm:$0xff] %v2602
    %2611 = vst [vmem:[#allocation9 + $0x30] sm:$0xff] %v2603
    %2612 = vst [vmem:[#allocation9 + $0x38] sm:$0xff] %v2604
    // Predicated region
    $region34: #{tpu_custom_call.1} parent=1 // pred_check
      _
    $region35: #{tpu_custom_call.1} parent=1 // pred_check_branch
      %2614 = sbr.rel (0) target = $region37
    $region36: #{tpu_custom_call.1} parent=1 // pred_region
      %2616 = vsyncadd [#allocation5], 0
      %s2617 = sshll.u32 [#allocation9], 4
      %s2618 = int_to_ptr.vmem [resolvable:$true] %s2617
      %s2619 = sshll.u32 %s5, 4
      %s2620 = int_to_ptr.hbm [resolvable:$true] %s2619
      %2625 = dma.vmem_to_hbm [thread:$0]  %s2618, 1024, %s2620, [#allocation5], 128, 128, 8
    $region37: #{tpu_custom_call.1} parent=1 // pred_fallthru
      _
    // Predicated region
    $region38: #{tpu_custom_call.1} parent=1 // pred_check
      _
    $region39: #{tpu_custom_call.1} parent=1 // pred_check_branch
      %2627 = sbr.rel (0) target = $region41
    $region40: #{tpu_custom_call.1} parent=1 // pred_region
      %2629 = dma.done [#allocation5], 1024
    $region41: #{tpu_custom_call.1} parent=1 // pred_fallthru
      _
    %2630 = vsyncpa [#allocation4], 1
    %2631 = vsyncpa [#allocation7], 1
    %2632 = vsyncpa [#allocation5], 1

</llo_original>
